<compile_context>
chip_gen: v5e
topology: v5e:2x2
jax: 0.10.0
libtpu: 0.0.40
codegen_flags: <defaults>
</compile_context>

<pallas_src>
import numpy as np
import jax
import jax.numpy as jnp
from jax.experimental import pallas as pl
from jax.experimental.pallas import tpu as pltpu


# Channel counts padded to multiples of 8 so every in-kernel sublane concat is
# tile aligned (padded channels carry zero weights/bias and stay exactly 0).
_CIN_P = 8    # network input   3 -> 8   (layer-1 K = 4*4*8 = 128)
_C1_P = 16    # enc1 output    12 -> 16
_C2_P = 24    # enc2 output    24
_C3_P = 16    # dec1 output    12 -> 16
_C4_P = 8     # dec2 output     8
_C5_P = 8     # dec3 output     3 -> 8   (stored lane-dense, stripped outside)


# ---------------------------------------------------------------------------
# In-kernel building blocks.  An activation is a single 2D value A : (C, L)
# holding one image in "flat" layout: row y occupies lanes [y*S, y*S + W) for
# a static row stride S >= W; lanes past W in a row block are don't-care
# gutters that are never selected by downstream operators.
# ---------------------------------------------------------------------------

def _conv_layer(a, h, s, w, wmat, bias, kh, kw, act):
    """Valid stride-1 conv as ONE MXU matmul over a whole-image im2col matrix.

    Patch-row ordering is k = kw*(KH*C) + kh*C + c, matching prepare_params().
    The output keeps the input row stride s; valid width shrinks to w-kw+1.
    """
    ho, wo = h - kh + 1, w - kw + 1
    lb = (ho - 1) * s + w
    bm = jnp.concatenate([a[:, dy * s: dy * s + lb] for dy in range(kh)],
                         axis=0)                                   # (kh*C, lb)
    ncol = (ho - 1) * s + wo
    p = jnp.concatenate([bm[:, dx: dx + ncol] for dx in range(kw)], axis=0)
    out = jnp.dot(wmat, p, preferred_element_type=jnp.float32) + bias
    return act(out)                                                # (Cout, ncol)


def _pool_layer(a, h, s, w, sel):
    """2x2 / stride-2 max pool (floor mode): two whole-image maxes plus one
    column-selection matmul; output is gutter-free with stride = w // 2."""
    span = (h - 2) * s + w
    rmax = jnp.maximum(a[:, 0:span], a[:, s:s + span])             # rows y,y+1
    pmax = jnp.maximum(rmax[:, 0:span - 1], rmax[:, 1:span])       # cols x,x+1
    return jnp.dot(pmax, sel, preferred_element_type=jnp.float32)


# ---------------------------------------------------------------------------
# Trace-time constant 0/1 operators (pool selection, zero-dilation, output
# compaction) -- built once in numpy, passed to the kernel as inputs.
# ---------------------------------------------------------------------------

def _pool_select(h, s, w):
    hp, wp = h // 2, w // 2
    sel = np.zeros(((h - 2) * s + w - 1, hp * wp), np.float32)
    for i in range(hp):
        for j in range(wp):
            sel[2 * i * s + 2 * j, i * wp + j] = 1.0
    return sel


def _dilate_matrix(h, s, w, length, stride, pad):
    hd = (h - 1) * stride + 1 + 2 * pad
    wd = (w - 1) * stride + 1 + 2 * pad
    m = np.zeros((length, hd * wd), np.float32)
    for y in range(h):
        for x in range(w):
            m[y * s + x, (pad + y * stride) * wd + pad + x * stride] = 1.0
    return m


def _compact_select(h, s, w):
    m = np.zeros(((h - 1) * s + w, h * w), np.float32)
    for y in range(h):
        for x in range(w):
            m[y * s + x, y * w + x] = 1.0
    return m


# ---------------------------------------------------------------------------
# One-time weight preprocessing (hoisted out of the forward pass).
# ---------------------------------------------------------------------------

def _pad_to(a, axis, size):
    pad = [(0, 0)] * a.ndim
    pad[axis] = (0, size - a.shape[axis])
    return jnp.pad(a, pad)


def _conv_weight_matrix(w, cin_pad, cout_pad):
    """torch Conv2d weight (Cout, Cin, KH, KW) -> (cout_pad, KW*KH*cin_pad)."""
    w = _pad_to(_pad_to(w, 1, cin_pad), 0, cout_pad)
    return jnp.transpose(w, (0, 3, 2, 1)).reshape(cout_pad, -1)


def _tconv_weight_matrix(w, cin_pad, cout_pad):
    """torch ConvTranspose2d weight (Cin, Cout, KH, KW): flip spatially, swap
    in/out channels -> equivalent Conv2d weight, then reorder as above."""
    w_conv = jnp.transpose(jnp.flip(w, (2, 3)), (1, 0, 2, 3))
    return _conv_weight_matrix(w_conv, cin_pad, cout_pad)


def _bias_col(b, cout_pad):
    return _pad_to(b, 0, cout_pad).reshape(cout_pad, 1)


def prepare_params(params):
    return {
        "w1": _conv_weight_matrix(params["enc1_w"], _CIN_P, _C1_P),
        "b1": _bias_col(params["enc1_b"], _C1_P),
        "w2": _conv_weight_matrix(params["enc2_w"], _C1_P, _C2_P),
        "b2": _bias_col(params["enc2_b"], _C2_P),
        "w3": _tconv_weight_matrix(params["dec1_w"], _C2_P, _C3_P),
        "b3": _bias_col(params["dec1_b"], _C3_P),
        "w4": _tconv_weight_matrix(params["dec2_w"], _C3_P, _C4_P),
        "b4": _bias_col(params["dec2_b"], _C4_P),
        "w5": _tconv_weight_matrix(params["dec3_w"], _C4_P, _C5_P),
        "b5": _bias_col(params["dec3_b"], _C5_P),
    }


def init_params(key):
    ks = jax.random.split(key, 10)
    s = 0.1
    return {
        # encoder: Conv2d(3,12,4), Conv2d(12,24,3)   (PyTorch layouts)
        "enc1_w": s * jax.random.normal(ks[0], (12, 3, 4, 4), jnp.float32),
        "enc1_b": s * jax.random.normal(ks[1], (12,), jnp.float32),
        "enc2_w": s * jax.random.normal(ks[2], (24, 12, 3, 3), jnp.float32),
        "enc2_b": s * jax.random.normal(ks[3], (24,), jnp.float32),
        # decoder: ConvTranspose2d(24,12,3,s=2), (12,8,3,s=2), (8,3,5,s=1)
        "dec1_w": s * jax.random.normal(ks[4], (24, 12, 3, 3), jnp.float32),
        "dec1_b": s * jax.random.normal(ks[5], (12,), jnp.float32),
        "dec2_w": s * jax.random.normal(ks[6], (12, 8, 3, 3), jnp.float32),
        "dec2_b": s * jax.random.normal(ks[7], (8,), jnp.float32),
        "dec3_w": s * jax.random.normal(ks[8], (8, 3, 5, 5), jnp.float32),
        "dec3_b": s * jax.random.normal(ks[9], (3,), jnp.float32),
    }


# ---------------------------------------------------------------------------
# Fused forward pass.
# ---------------------------------------------------------------------------

def autoencoder_forward(x_nchw, prep):
    N, cin, H0, W0 = x_nchw.shape
    assert cin == 3

    # Static shape chain through the network (Python ints).
    H1, W1 = H0 - 3, W0 - 3                           # Conv2d(3,12,4)
    H2, W2 = H1 // 2, W1 // 2                         # MaxPool2d(2)
    H3, W3 = H2 - 2, W2 - 2                           # Conv2d(12,24,3)
    H4, W4 = H3 // 2, W3 // 2                         # MaxPool2d(2)
    Hd1, Wd1 = (H4 - 1) * 2 + 5, (W4 - 1) * 2 + 5     # dilate s=2, pad 2
    H5, W5 = Hd1 - 2, Wd1 - 2                         # ConvT(24,12,3,s=2)
    Hd2, Wd2 = (H5 - 1) * 2 + 5, (W5 - 1) * 2 + 5
    H6, W6 = Hd2 - 2, Wd2 - 2                         # ConvT(12,8,3,s=2)
    Hd3, Wd3 = H6 + 8, W6 + 8                         # pad 4 (k=5, s=1)
    H7, W7 = Hd3 - 4, Wd3 - 4                         # ConvT(8,3,5,s=1)

    # Constant 0/1 operators.
    sel_p1 = jnp.asarray(_pool_select(H1, W0, W1))
    sel_p2 = jnp.asarray(_pool_select(H3, W2, W3))
    dil_1 = jnp.asarray(_dilate_matrix(H4, W4, W4, H4 * W4, 2, 2))
    dil_2 = jnp.asarray(_dilate_matrix(H5, Wd1, W5, (H5 - 1) * Wd1 + W5, 2, 2))
    dil_3 = jnp.asarray(_dilate_matrix(H6, Wd2, W6, (H6 - 1) * Wd2 + W6, 1, 4))
    sel_o = jnp.asarray(_compact_select(H7, Wd3, W7))

    def kernel(x_ref, w1, b1, w2, b2, w3, b3, w4, b4, w5, b5,
               sp1, sp2, dm1, dm2, dm3, so, o_ref):
        relu = lambda v: jnp.maximum(v, 0.0)
        # ----------------------------- encoder -----------------------------
        a0 = x_ref[0]                                                # (8, H0*W0)
        a1 = _conv_layer(a0, H0, W0, W0, w1[...], b1[...], 4, 4, relu)
        p1 = _pool_layer(a1, H1, W0, W1, sp1[...])
        a2 = _conv_layer(p1, H2, W2, W2, w2[...], b2[...], 3, 3, jnp.tanh)
        p2 = _pool_layer(a2, H3, W2, W3, sp2[...])
        # ----------------------------- decoder -----------------------------
        d1 = jnp.dot(p2, dm1[...], preferred_element_type=jnp.float32)
        a3 = _conv_layer(d1, Hd1, Wd1, Wd1, w3[...], b3[...], 3, 3, relu)
        d2 = jnp.dot(a3, dm2[...], preferred_element_type=jnp.float32)
        a4 = _conv_layer(d2, Hd2, Wd2, Wd2, w4[...], b4[...], 3, 3, relu)
        d3 = jnp.dot(a4, dm3[...], preferred_element_type=jnp.float32)
        a5 = _conv_layer(d3, Hd3, Wd3, Wd3, w5[...], b5[...], 5, 5, jnp.tanh)
        # Single lane-dense store of the valid output columns.
        o_ref[0] = jnp.dot(a5, so[...], preferred_element_type=jnp.float32)

    # Input prep: zero-pad channels 3->8 once, flatten HxW into lanes.
    x = jnp.pad(x_nchw, ((0, 0), (0, _CIN_P - 3), (0, 0), (0, 0)))
    x = x.reshape(N, _CIN_P, H0 * W0)

    consts = [prep["w1"], prep["b1"], prep["w2"], prep["b2"], prep["w3"],
              prep["b3"], prep["w4"], prep["b4"], prep["w5"], prep["b5"],
              sel_p1, sel_p2, dil_1, dil_2, dil_3, sel_o]

    # Constant operands use a grid-independent index_map, so they are DMA'd
    # into VMEM once and never re-copied across grid steps.
    in_specs = [pl.BlockSpec((1, _CIN_P, H0 * W0), lambda n: (n, 0, 0))]
    in_specs += [pl.BlockSpec(c.shape, lambda n: (0, 0)) for c in consts]

    out = pl.pallas_call(
        kernel,
        out_shape=jax.ShapeDtypeStruct((N, _C5_P, H7 * W7), jnp.float32),
        grid=(N,),
        in_specs=in_specs,
        out_specs=pl.BlockSpec((1, _C5_P, H7 * W7), lambda n: (n, 0, 0)),
        compiler_params=pltpu.CompilerParams(
            dimension_semantics=("parallel",)),
    )(x, *consts)

    # Strip channel padding, unflatten spatial dims -> NCHW.
    return out[:, :3, :].reshape(N, 3, H7, W7)


# ---------------------------------------------------------------------------
# Pure-JAX (XLA) reference for numerical verification.
# ---------------------------------------------------------------------------

def _reference_forward(x, p):
    dn = ("NCHW", "OIHW", "NCHW")
    hi = jax.lax.Precision.HIGHEST

    def conv(h, w, b):
        y = jax.lax.conv_general_dilated(h, w, (1, 1), "VALID",
                                         dimension_numbers=dn, precision=hi)
        return y + b[None, :, None, None]

    def tconv(h, w, b, s):
        k = w.shape[-1]
        w2 = jnp.transpose(w[:, :, ::-1, ::-1], (1, 0, 2, 3))
        y = jax.lax.conv_general_dilated(h, w2, (1, 1),
                                         [(k - 1, k - 1), (k - 1, k - 1)],
                                         lhs_dilation=(s, s),
                                         dimension_numbers=dn, precision=hi)
        return y + b[None, :, None, None]

    def pool(h):
        return jax.lax.reduce_window(h, -jnp.inf, jax.lax.max,
                                     (1, 1, 2, 2), (1, 1, 2, 2), "VALID")

    h = jax.nn.relu(conv(x, p["enc1_w"], p["enc1_b"]))
    h = pool(h)
    h = jnp.tanh(conv(h, p["enc2_w"], p["enc2_b"]))
    h = pool(h)
    h = jax.nn.relu(tconv(h, p["dec1_w"], p["dec1_b"], 2))
    h = jax.nn.relu(tconv(h, p["dec2_w"], p["dec2_b"], 2))
    h = jnp.tanh(tconv(h, p["dec3_w"], p["dec3_b"], 1))
    return h


if __name__ == "__main__":
    key = jax.random.PRNGKey(0)
    k_x, k_p = jax.random.split(key)
    x = jax.random.normal(k_x, (2, 3, 16, 16), jnp.float32)

    params = init_params(k_p)
    prep = prepare_params(params)          # one-time weight prep (hoisted)

    fwd = jax.jit(autoencoder_forward)
    out = fwd(x, prep)
    jax.block_until_ready(out)

    # 16x16 input: conv4->13, pool->6, conv3->4, pool->2,
    # tconv(3,s2)->5, tconv(3,s2)->11, tconv(5,s1)->15  => (2, 3, 15, 15)
    assert out.shape == (2, 3, 15, 15), out.shape
    assert bool(jnp.all(jnp.isfinite(out)))

    ref = _reference_forward(x, params)
    err = float(jnp.max(jnp.abs(out - ref)))
    assert err < 5e-2, f"max abs err vs XLA reference: {err}"

    print("KERNEL_OK")
</pallas_src>

<mosaic_0001>
module attributes {stable_mosaic.version = 11 : i64} {
  func.func @kernel(%arg0: i32, %arg1: memref<1x8x256xf32, #tpu.memory_space<vmem>>, %arg2: memref<16x128xf32, #tpu.memory_space<vmem>>, %arg3: memref<16x1xf32, #tpu.memory_space<vmem>>, %arg4: memref<24x144xf32, #tpu.memory_space<vmem>>, %arg5: memref<24x1xf32, #tpu.memory_space<vmem>>, %arg6: memref<16x216xf32, #tpu.memory_space<vmem>>, %arg7: memref<16x1xf32, #tpu.memory_space<vmem>>, %arg8: memref<8x144xf32, #tpu.memory_space<vmem>>, %arg9: memref<8x1xf32, #tpu.memory_space<vmem>>, %arg10: memref<8x200xf32, #tpu.memory_space<vmem>>, %arg11: memref<8x1xf32, #tpu.memory_space<vmem>>, %arg12: memref<188x36xf32, #tpu.memory_space<vmem>>, %arg13: memref<15x4xf32, #tpu.memory_space<vmem>>, %arg14: memref<4x49xf32, #tpu.memory_space<vmem>>, %arg15: memref<33x169xf32, #tpu.memory_space<vmem>>, %arg16: memref<141x361xf32, #tpu.memory_space<vmem>>, %arg17: memref<281x225xf32, #tpu.memory_space<vmem>>, %arg18: memref<1x8x225xf32, #tpu.memory_space<vmem>>) attributes {dimension_semantics = [#tpu.dimension_semantics<parallel>], iteration_bounds = array<i64: 2>, scalar_prefetch = 0 : i64, scratch_operands = 0 : i64, tpu.core_type = #tpu.core_type<tc>, window_params = [{transform_indices = @transform_0, window_bounds = array<i64: 1, 8, 256>}, {pipeline_mode = #tpu.pipeline_mode<synchronous>, transform_indices = @transform_1, window_bounds = array<i64: 16, 128>}, {pipeline_mode = #tpu.pipeline_mode<synchronous>, transform_indices = @transform_2, window_bounds = array<i64: 16, 1>}, {pipeline_mode = #tpu.pipeline_mode<synchronous>, transform_indices = @transform_3, window_bounds = array<i64: 24, 144>}, {pipeline_mode = #tpu.pipeline_mode<synchronous>, transform_indices = @transform_4, window_bounds = array<i64: 24, 1>}, {pipeline_mode = #tpu.pipeline_mode<synchronous>, transform_indices = @transform_5, window_bounds = array<i64: 16, 216>}, {pipeline_mode = #tpu.pipeline_mode<synchronous>, transform_indices = @transform_6, window_bounds = array<i64: 16, 1>}, {pipeline_mode = #tpu.pipeline_mode<synchronous>, transform_indices = @transform_7, window_bounds = array<i64: 8, 144>}, {pipeline_mode = #tpu.pipeline_mode<synchronous>, transform_indices = @transform_8, window_bounds = array<i64: 8, 1>}, {pipeline_mode = #tpu.pipeline_mode<synchronous>, transform_indices = @transform_9, window_bounds = array<i64: 8, 200>}, {pipeline_mode = #tpu.pipeline_mode<synchronous>, transform_indices = @transform_10, window_bounds = array<i64: 8, 1>}, {pipeline_mode = #tpu.pipeline_mode<synchronous>, transform_indices = @transform_11, window_bounds = array<i64: 188, 36>}, {pipeline_mode = #tpu.pipeline_mode<synchronous>, transform_indices = @transform_12, window_bounds = array<i64: 15, 4>}, {pipeline_mode = #tpu.pipeline_mode<synchronous>, transform_indices = @transform_13, window_bounds = array<i64: 4, 49>}, {pipeline_mode = #tpu.pipeline_mode<synchronous>, transform_indices = @transform_14, window_bounds = array<i64: 33, 169>}, {pipeline_mode = #tpu.pipeline_mode<synchronous>, transform_indices = @transform_15, window_bounds = array<i64: 141, 361>}, {pipeline_mode = #tpu.pipeline_mode<synchronous>, transform_indices = @transform_16, window_bounds = array<i64: 281, 225>}, {transform_indices = @transform_17, window_bounds = array<i64: 1, 8, 225>}]} {
    %c0 = arith.constant 0 : index
    %c0_0 = arith.constant 0 : index
    %c0_1 = arith.constant 0 : index
    %0 = vector.load %arg1[%c0, %c0_0, %c0_1] : memref<1x8x256xf32, #tpu.memory_space<vmem>>, vector<1x8x256xf32>
    %1 = vector.shape_cast %0 : vector<1x8x256xf32> to vector<8x256xf32>
    %c0_2 = arith.constant 0 : index
    %c0_3 = arith.constant 0 : index
    %2 = vector.load %arg2[%c0_2, %c0_3] : memref<16x128xf32, #tpu.memory_space<vmem>>, vector<16x128xf32>
    %c0_4 = arith.constant 0 : index
    %c0_5 = arith.constant 0 : index
    %3 = vector.load %arg3[%c0_4, %c0_5] : memref<16x1xf32, #tpu.memory_space<vmem>>, vector<16x1xf32>
    %4 = vector.extract_strided_slice %1 {offsets = [0, 0], sizes = [8, 208], strides = [1, 1]} : vector<8x256xf32> to vector<8x208xf32>
    %5 = vector.extract_strided_slice %1 {offsets = [0, 16], sizes = [8, 208], strides = [1, 1]} : vector<8x256xf32> to vector<8x208xf32>
    %6 = vector.extract_strided_slice %1 {offsets = [0, 32], sizes = [8, 208], strides = [1, 1]} : vector<8x256xf32> to vector<8x208xf32>
    %7 = vector.extract_strided_slice %1 {offsets = [0, 48], sizes = [8, 208], strides = [1, 1]} : vector<8x256xf32> to vector<8x208xf32>
    %8 = tpu.concatenate %4, %5, %6, %7 in 0 : vector<8x208xf32>, vector<8x208xf32>, vector<8x208xf32>, vector<8x208xf32> -> vector<32x208xf32>
    %9 = vector.extract_strided_slice %8 {offsets = [0, 0], sizes = [32, 205], strides = [1, 1]} : vector<32x208xf32> to vector<32x205xf32>
    %10 = vector.extract_strided_slice %8 {offsets = [0, 1], sizes = [32, 205], strides = [1, 1]} : vector<32x208xf32> to vector<32x205xf32>
    %11 = vector.extract_strided_slice %8 {offsets = [0, 2], sizes = [32, 205], strides = [1, 1]} : vector<32x208xf32> to vector<32x205xf32>
    %12 = vector.extract_strided_slice %8 {offsets = [0, 3], sizes = [32, 205], strides = [1, 1]} : vector<32x208xf32> to vector<32x205xf32>
    %13 = tpu.concatenate %9, %10, %11, %12 in 0 : vector<32x205xf32>, vector<32x205xf32>, vector<32x205xf32>, vector<32x205xf32> -> vector<128x205xf32>
    %cst = arith.constant dense<0.000000e+00> : vector<16x205xf32>
    %14 = tpu.matmul %2, %13, %cst {dimension_numbers = #tpu.dot_dimension_numbers<[1], [0], [0], [1], [0, 0, 1, 1], [], []>} : vector<16x128xf32>, vector<128x205xf32>, vector<16x205xf32> -> vector<16x205xf32>
    %15 = vector.broadcast %3 : vector<16x1xf32> to vector<16x205xf32>
    %16 = arith.addf %14, %15 : vector<16x205xf32>
    %cst_6 = arith.constant 0.000000e+00 : f32
    %17 = vector.broadcast %cst_6 : f32 to vector<16x205xf32>
    %18 = arith.maximumf %16, %17 : vector<16x205xf32>
    %c0_7 = arith.constant 0 : index
    %c0_8 = arith.constant 0 : index
    %19 = vector.load %arg12[%c0_7, %c0_8] : memref<188x36xf32, #tpu.memory_space<vmem>>, vector<188x36xf32>
    %20 = vector.extract_strided_slice %18 {offsets = [0, 0], sizes = [16, 189], strides = [1, 1]} : vector<16x205xf32> to vector<16x189xf32>
    %21 = vector.extract_strided_slice %18 {offsets = [0, 16], sizes = [16, 189], strides = [1, 1]} : vector<16x205xf32> to vector<16x189xf32>
    %22 = arith.maximumf %20, %21 : vector<16x189xf32>
    %23 = vector.extract_strided_slice %22 {offsets = [0, 0], sizes = [16, 188], strides = [1, 1]} : vector<16x189xf32> to vector<16x188xf32>
    %24 = vector.extract_strided_slice %22 {offsets = [0, 1], sizes = [16, 188], strides = [1, 1]} : vector<16x189xf32> to vector<16x188xf32>
    %25 = arith.maximumf %23, %24 : vector<16x188xf32>
    %cst_9 = arith.constant dense<0.000000e+00> : vector<16x36xf32>
    %26 = tpu.matmul %25, %19, %cst_9 {dimension_numbers = #tpu.dot_dimension_numbers<[1], [0], [0], [1], [0, 0, 1, 1], [], []>} : vector<16x188xf32>, vector<188x36xf32>, vector<16x36xf32> -> vector<16x36xf32>
    %c0_10 = arith.constant 0 : index
    %c0_11 = arith.constant 0 : index
    %27 = vector.load %arg4[%c0_10, %c0_11] : memref<24x144xf32, #tpu.memory_space<vmem>>, vector<24x144xf32>
    %c0_12 = arith.constant 0 : index
    %c0_13 = arith.constant 0 : index
    %28 = vector.load %arg5[%c0_12, %c0_13] : memref<24x1xf32, #tpu.memory_space<vmem>>, vector<24x1xf32>
    %29 = vector.extract_strided_slice %26 {offsets = [0, 0], sizes = [16, 24], strides = [1, 1]} : vector<16x36xf32> to vector<16x24xf32>
    %30 = vector.extract_strided_slice %26 {offsets = [0, 6], sizes = [16, 24], strides = [1, 1]} : vector<16x36xf32> to vector<16x24xf32>
    %31 = vector.extract_strided_slice %26 {offsets = [0, 12], sizes = [16, 24], strides = [1, 1]} : vector<16x36xf32> to vector<16x24xf32>
    %32 = tpu.concatenate %29, %30, %31 in 0 : vector<16x24xf32>, vector<16x24xf32>, vector<16x24xf32> -> vector<48x24xf32>
    %33 = vector.extract_strided_slice %32 {offsets = [0, 0], sizes = [48, 22], strides = [1, 1]} : vector<48x24xf32> to vector<48x22xf32>
    %34 = vector.extract_strided_slice %32 {offsets = [0, 1], sizes = [48, 22], strides = [1, 1]} : vector<48x24xf32> to vector<48x22xf32>
    %35 = vector.extract_strided_slice %32 {offsets = [0, 2], sizes = [48, 22], strides = [1, 1]} : vector<48x24xf32> to vector<48x22xf32>
    %36 = tpu.concatenate %33, %34, %35 in 0 : vector<48x22xf32>, vector<48x22xf32>, vector<48x22xf32> -> vector<144x22xf32>
    %cst_14 = arith.constant dense<0.000000e+00> : vector<24x22xf32>
    %37 = tpu.matmul %27, %36, %cst_14 {dimension_numbers = #tpu.dot_dimension_numbers<[1], [0], [0], [1], [0, 0, 1, 1], [], []>} : vector<24x144xf32>, vector<144x22xf32>, vector<24x22xf32> -> vector<24x22xf32>
    %38 = vector.broadcast %28 : vector<24x1xf32> to vector<24x22xf32>
    %39 = arith.addf %37, %38 : vector<24x22xf32>
    %40 = math.tanh %39 : vector<24x22xf32>
    %c0_15 = arith.constant 0 : index
    %c0_16 = arith.constant 0 : index
    %41 = vector.load %arg13[%c0_15, %c0_16] : memref<15x4xf32, #tpu.memory_space<vmem>>, vector<15x4xf32>
    %42 = vector.extract_strided_slice %40 {offsets = [0, 0], sizes = [24, 16], strides = [1, 1]} : vector<24x22xf32> to vector<24x16xf32>
    %43 = vector.extract_strided_slice %40 {offsets = [0, 6], sizes = [24, 16], strides = [1, 1]} : vector<24x22xf32> to vector<24x16xf32>
    %44 = arith.maximumf %42, %43 : vector<24x16xf32>
    %45 = vector.extract_strided_slice %44 {offsets = [0, 0], sizes = [24, 15], strides = [1, 1]} : vector<24x16xf32> to vector<24x15xf32>
    %46 = vector.extract_strided_slice %44 {offsets = [0, 1], sizes = [24, 15], strides = [1, 1]} : vector<24x16xf32> to vector<24x15xf32>
    %47 = arith.maximumf %45, %46 : vector<24x15xf32>
    %cst_17 = arith.constant dense<0.000000e+00> : vector<24x4xf32>
    %48 = tpu.matmul %47, %41, %cst_17 {dimension_numbers = #tpu.dot_dimension_numbers<[1], [0], [0], [1], [0, 0, 1, 1], [], []>} : vector<24x15xf32>, vector<15x4xf32>, vector<24x4xf32> -> vector<24x4xf32>
    %c0_18 = arith.constant 0 : index
    %c0_19 = arith.constant 0 : index
    %49 = vector.load %arg14[%c0_18, %c0_19] : memref<4x49xf32, #tpu.memory_space<vmem>>, vector<4x49xf32>
    %cst_20 = arith.constant dense<0.000000e+00> : vector<24x49xf32>
    %50 = tpu.matmul %48, %49, %cst_20 {dimension_numbers = #tpu.dot_dimension_numbers<[1], [0], [0], [1], [0, 0, 1, 1], [], []>} : vector<24x4xf32>, vector<4x49xf32>, vector<24x49xf32> -> vector<24x49xf32>
    %c0_21 = arith.constant 0 : index
    %c0_22 = arith.constant 0 : index
    %51 = vector.load %arg6[%c0_21, %c0_22] : memref<16x216xf32, #tpu.memory_space<vmem>>, vector<16x216xf32>
    %c0_23 = arith.constant 0 : index
    %c0_24 = arith.constant 0 : index
    %52 = vector.load %arg7[%c0_23, %c0_24] : memref<16x1xf32, #tpu.memory_space<vmem>>, vector<16x1xf32>
    %53 = vector.extract_strided_slice %50 {offsets = [0, 0], sizes = [24, 35], strides = [1, 1]} : vector<24x49xf32> to vector<24x35xf32>
    %54 = vector.extract_strided_slice %50 {offsets = [0, 7], sizes = [24, 35], strides = [1, 1]} : vector<24x49xf32> to vector<24x35xf32>
    %55 = vector.extract_strided_slice %50 {offsets = [0, 14], sizes = [24, 35], strides = [1, 1]} : vector<24x49xf32> to vector<24x35xf32>
    %56 = tpu.concatenate %53, %54, %55 in 0 : vector<24x35xf32>, vector<24x35xf32>, vector<24x35xf32> -> vector<72x35xf32>
    %57 = vector.extract_strided_slice %56 {offsets = [0, 0], sizes = [72, 33], strides = [1, 1]} : vector<72x35xf32> to vector<72x33xf32>
    %58 = vector.extract_strided_slice %56 {offsets = [0, 1], sizes = [72, 33], strides = [1, 1]} : vector<72x35xf32> to vector<72x33xf32>
    %59 = vector.extract_strided_slice %56 {offsets = [0, 2], sizes = [72, 33], strides = [1, 1]} : vector<72x35xf32> to vector<72x33xf32>
    %60 = tpu.concatenate %57, %58, %59 in 0 : vector<72x33xf32>, vector<72x33xf32>, vector<72x33xf32> -> vector<216x33xf32>
    %cst_25 = arith.constant dense<0.000000e+00> : vector<16x33xf32>
    %61 = tpu.matmul %51, %60, %cst_25 {dimension_numbers = #tpu.dot_dimension_numbers<[1], [0], [0], [1], [0, 0, 1, 1], [], []>} : vector<16x216xf32>, vector<216x33xf32>, vector<16x33xf32> -> vector<16x33xf32>
    %62 = vector.broadcast %52 : vector<16x1xf32> to vector<16x33xf32>
    %63 = arith.addf %61, %62 : vector<16x33xf32>
    %cst_26 = arith.constant 0.000000e+00 : f32
    %64 = vector.broadcast %cst_26 : f32 to vector<16x33xf32>
    %65 = arith.maximumf %63, %64 : vector<16x33xf32>
    %c0_27 = arith.constant 0 : index
    %c0_28 = arith.constant 0 : index
    %66 = vector.load %arg15[%c0_27, %c0_28] : memref<33x169xf32, #tpu.memory_space<vmem>>, vector<33x169xf32>
    %cst_29 = arith.constant dense<0.000000e+00> : vector<16x169xf32>
    %67 = tpu.matmul %65, %66, %cst_29 {dimension_numbers = #tpu.dot_dimension_numbers<[1], [0], [0], [1], [0, 0, 1, 1], [], []>} : vector<16x33xf32>, vector<33x169xf32>, vector<16x169xf32> -> vector<16x169xf32>
    %c0_30 = arith.constant 0 : index
    %c0_31 = arith.constant 0 : index
    %68 = vector.load %arg8[%c0_30, %c0_31] : memref<8x144xf32, #tpu.memory_space<vmem>>, vector<8x144xf32>
    %c0_32 = arith.constant 0 : index
    %c0_33 = arith.constant 0 : index
    %69 = vector.load %arg9[%c0_32, %c0_33] : memref<8x1xf32, #tpu.memory_space<vmem>>, vector<8x1xf32>
    %70 = vector.extract_strided_slice %67 {offsets = [0, 0], sizes = [16, 143], strides = [1, 1]} : vector<16x169xf32> to vector<16x143xf32>
    %71 = vector.extract_strided_slice %67 {offsets = [0, 13], sizes = [16, 143], strides = [1, 1]} : vector<16x169xf32> to vector<16x143xf32>
    %72 = vector.extract_strided_slice %67 {offsets = [0, 26], sizes = [16, 143], strides = [1, 1]} : vector<16x169xf32> to vector<16x143xf32>
    %73 = tpu.concatenate %70, %71, %72 in 0 : vector<16x143xf32>, vector<16x143xf32>, vector<16x143xf32> -> vector<48x143xf32>
    %74 = vector.extract_strided_slice %73 {offsets = [0, 0], sizes = [48, 141], strides = [1, 1]} : vector<48x143xf32> to vector<48x141xf32>
    %75 = vector.extract_strided_slice %73 {offsets = [0, 1], sizes = [48, 141], strides = [1, 1]} : vector<48x143xf32> to vector<48x141xf32>
    %76 = vector.extract_strided_slice %73 {offsets = [0, 2], sizes = [48, 141], strides = [1, 1]} : vector<48x143xf32> to vector<48x141xf32>
    %77 = tpu.concatenate %74, %75, %76 in 0 : vector<48x141xf32>, vector<48x141xf32>, vector<48x141xf32> -> vector<144x141xf32>
    %cst_34 = arith.constant dense<0.000000e+00> : vector<8x141xf32>
    %78 = tpu.matmul %68, %77, %cst_34 {dimension_numbers = #tpu.dot_dimension_numbers<[1], [0], [0], [1], [0, 0, 1, 1], [], []>} : vector<8x144xf32>, vector<144x141xf32>, vector<8x141xf32> -> vector<8x141xf32>
    %79 = vector.broadcast %69 : vector<8x1xf32> to vector<8x141xf32>
    %80 = arith.addf %78, %79 : vector<8x141xf32>
    %cst_35 = arith.constant 0.000000e+00 : f32
    %81 = vector.broadcast %cst_35 : f32 to vector<8x141xf32>
    %82 = arith.maximumf %80, %81 : vector<8x141xf32>
    %c0_36 = arith.constant 0 : index
    %c0_37 = arith.constant 0 : index
    %83 = vector.load %arg16[%c0_36, %c0_37] : memref<141x361xf32, #tpu.memory_space<vmem>>, vector<141x361xf32>
    %cst_38 = arith.constant dense<0.000000e+00> : vector<8x361xf32>
    %84 = tpu.matmul %82, %83, %cst_38 {dimension_numbers = #tpu.dot_dimension_numbers<[1], [0], [0], [1], [0, 0, 1, 1], [], []>} : vector<8x141xf32>, vector<141x361xf32>, vector<8x361xf32> -> vector<8x361xf32>
    %c0_39 = arith.constant 0 : index
    %c0_40 = arith.constant 0 : index
    %85 = vector.load %arg10[%c0_39, %c0_40] : memref<8x200xf32, #tpu.memory_space<vmem>>, vector<8x200xf32>
    %c0_41 = arith.constant 0 : index
    %c0_42 = arith.constant 0 : index
    %86 = vector.load %arg11[%c0_41, %c0_42] : memref<8x1xf32, #tpu.memory_space<vmem>>, vector<8x1xf32>
    %87 = vector.extract_strided_slice %84 {offsets = [0, 0], sizes = [8, 285], strides = [1, 1]} : vector<8x361xf32> to vector<8x285xf32>
    %88 = vector.extract_strided_slice %84 {offsets = [0, 19], sizes = [8, 285], strides = [1, 1]} : vector<8x361xf32> to vector<8x285xf32>
    %89 = vector.extract_strided_slice %84 {offsets = [0, 38], sizes = [8, 285], strides = [1, 1]} : vector<8x361xf32> to vector<8x285xf32>
    %90 = vector.extract_strided_slice %84 {offsets = [0, 57], sizes = [8, 285], strides = [1, 1]} : vector<8x361xf32> to vector<8x285xf32>
    %91 = vector.extract_strided_slice %84 {offsets = [0, 76], sizes = [8, 285], strides = [1, 1]} : vector<8x361xf32> to vector<8x285xf32>
    %92 = tpu.concatenate %87, %88, %89, %90, %91 in 0 : vector<8x285xf32>, vector<8x285xf32>, vector<8x285xf32>, vector<8x285xf32>, vector<8x285xf32> -> vector<40x285xf32>
    %93 = vector.extract_strided_slice %92 {offsets = [0, 0], sizes = [40, 281], strides = [1, 1]} : vector<40x285xf32> to vector<40x281xf32>
    %94 = vector.extract_strided_slice %92 {offsets = [0, 1], sizes = [40, 281], strides = [1, 1]} : vector<40x285xf32> to vector<40x281xf32>
    %95 = vector.extract_strided_slice %92 {offsets = [0, 2], sizes = [40, 281], strides = [1, 1]} : vector<40x285xf32> to vector<40x281xf32>
    %96 = vector.extract_strided_slice %92 {offsets = [0, 3], sizes = [40, 281], strides = [1, 1]} : vector<40x285xf32> to vector<40x281xf32>
    %97 = vector.extract_strided_slice %92 {offsets = [0, 4], sizes = [40, 281], strides = [1, 1]} : vector<40x285xf32> to vector<40x281xf32>
    %98 = tpu.concatenate %93, %94, %95, %96, %97 in 0 : vector<40x281xf32>, vector<40x281xf32>, vector<40x281xf32>, vector<40x281xf32>, vector<40x281xf32> -> vector<200x281xf32>
    %cst_43 = arith.constant dense<0.000000e+00> : vector<8x281xf32>
    %99 = tpu.matmul %85, %98, %cst_43 {dimension_numbers = #tpu.dot_dimension_numbers<[1], [0], [0], [1], [0, 0, 1, 1], [], []>} : vector<8x200xf32>, vector<200x281xf32>, vector<8x281xf32> -> vector<8x281xf32>
    %100 = vector.broadcast %86 : vector<8x1xf32> to vector<8x281xf32>
    %101 = arith.addf %99, %100 : vector<8x281xf32>
    %102 = math.tanh %101 : vector<8x281xf32>
    %c0_44 = arith.constant 0 : index
    %c0_45 = arith.constant 0 : index
    %103 = vector.load %arg17[%c0_44, %c0_45] : memref<281x225xf32, #tpu.memory_space<vmem>>, vector<281x225xf32>
    %cst_46 = arith.constant dense<0.000000e+00> : vector<8x225xf32>
    %104 = tpu.matmul %102, %103, %cst_46 {dimension_numbers = #tpu.dot_dimension_numbers<[1], [0], [0], [1], [0, 0, 1, 1], [], []>} : vector<8x281xf32>, vector<281x225xf32>, vector<8x225xf32> -> vector<8x225xf32>
    %c0_47 = arith.constant 0 : index
    %c0_48 = arith.constant 0 : index
    %c0_49 = arith.constant 0 : index
    %105 = vector.load %arg18[%c0_47, %c0_48, %c0_49] : memref<1x8x225xf32, #tpu.memory_space<vmem>>, vector<1x8x225xf32>
    %106 = vector.shape_cast %105 : vector<1x8x225xf32> to vector<8x225xf32>
    %107 = vector.shape_cast %104 : vector<8x225xf32> to vector<1x8x225xf32>
    tpu.vector_store %arg18[%c0_47, %c0_48, %c0_49], %107 {strides = array<i32>} : memref<1x8x225xf32, #tpu.memory_space<vmem>>, vector<1x8x225xf32>,
    return
  }
  func.func @transform_0(%arg0: i32) -> (i32, i32, i32) {
    %c0_i32 = arith.constant 0 : i32
    %c0_i32_0 = arith.constant 0 : i32
    %c0_i32_1 = arith.constant 0 : i32
    return %arg0, %c0_i32, %c0_i32_0 : i32, i32, i32
  }
  func.func @transform_1(%arg0: i32) -> (i32, i32) {
    %c0_i32 = arith.constant 0 : i32
    %c0_i32_0 = arith.constant 0 : i32
    %c0_i32_1 = arith.constant 0 : i32
    return %c0_i32, %c0_i32_0 : i32, i32
  }
  func.func @transform_2(%arg0: i32) -> (i32, i32) {
    %c0_i32 = arith.constant 0 : i32
    %c0_i32_0 = arith.constant 0 : i32
    %c0_i32_1 = arith.constant 0 : i32
    return %c0_i32, %c0_i32_0 : i32, i32
  }
  func.func @transform_3(%arg0: i32) -> (i32, i32) {
    %c0_i32 = arith.constant 0 : i32
    %c0_i32_0 = arith.constant 0 : i32
    %c0_i32_1 = arith.constant 0 : i32
    return %c0_i32, %c0_i32_0 : i32, i32
  }
  func.func @transform_4(%arg0: i32) -> (i32, i32) {
    %c0_i32 = arith.constant 0 : i32
    %c0_i32_0 = arith.constant 0 : i32
    %c0_i32_1 = arith.constant 0 : i32
    return %c0_i32, %c0_i32_0 : i32, i32
  }
  func.func @transform_5(%arg0: i32) -> (i32, i32) {
    %c0_i32 = arith.constant 0 : i32
    %c0_i32_0 = arith.constant 0 : i32
    %c0_i32_1 = arith.constant 0 : i32
    return %c0_i32, %c0_i32_0 : i32, i32
  }
  func.func @transform_6(%arg0: i32) -> (i32, i32) {
    %c0_i32 = arith.constant 0 : i32
    %c0_i32_0 = arith.constant 0 : i32
    %c0_i32_1 = arith.constant 0 : i32
    return %c0_i32, %c0_i32_0 : i32, i32
  }
  func.func @transform_7(%arg0: i32) -> (i32, i32) {
    %c0_i32 = arith.constant 0 : i32
    %c0_i32_0 = arith.constant 0 : i32
    %c0_i32_1 = arith.constant 0 : i32
    return %c0_i32, %c0_i32_0 : i32, i32
  }
  func.func @transform_8(%arg0: i32) -> (i32, i32) {
    %c0_i32 = arith.constant 0 : i32
    %c0_i32_0 = arith.constant 0 : i32
    %c0_i32_1 = arith.constant 0 : i32
    return %c0_i32, %c0_i32_0 : i32, i32
  }
  func.func @transform_9(%arg0: i32) -> (i32, i32) {
    %c0_i32 = arith.constant 0 : i32
    %c0_i32_0 = arith.constant 0 : i32
    %c0_i32_1 = arith.constant 0 : i32
    return %c0_i32, %c0_i32_0 : i32, i32
  }
  func.func @transform_10(%arg0: i32) -> (i32, i32) {
    %c0_i32 = arith.constant 0 : i32
    %c0_i32_0 = arith.constant 0 : i32
    %c0_i32_1 = arith.constant 0 : i32
    return %c0_i32, %c0_i32_0 : i32, i32
  }
  func.func @transform_11(%arg0: i32) -> (i32, i32) {
    %c0_i32 = arith.constant 0 : i32
    %c0_i32_0 = arith.constant 0 : i32
    %c0_i32_1 = arith.constant 0 : i32
    return %c0_i32, %c0_i32_0 : i32, i32
  }
  func.func @transform_12(%arg0: i32) -> (i32, i32) {
    %c0_i32 = arith.constant 0 : i32
    %c0_i32_0 = arith.constant 0 : i32
    %c0_i32_1 = arith.constant 0 : i32
    return %c0_i32, %c0_i32_0 : i32, i32
  }
  func.func @transform_13(%arg0: i32) -> (i32, i32) {
    %c0_i32 = arith.constant 0 : i32
    %c0_i32_0 = arith.constant 0 : i32
    %c0_i32_1 = arith.constant 0 : i32
    return %c0_i32, %c0_i32_0 : i32, i32
  }
  func.func @transform_14(%arg0: i32) -> (i32, i32) {
    %c0_i32 = arith.constant 0 : i32
    %c0_i32_0 = arith.constant 0 : i32
    %c0_i32_1 = arith.constant 0 : i32
    return %c0_i32, %c0_i32_0 : i32, i32
  }
  func.func @transform_15(%arg0: i32) -> (i32, i32) {
    %c0_i32 = arith.constant 0 : i32
    %c0_i32_0 = arith.constant 0 : i32
    %c0_i32_1 = arith.constant 0 : i32
    return %c0_i32, %c0_i32_0 : i32, i32
  }
  func.func @transform_16(%arg0: i32) -> (i32, i32) {
    %c0_i32 = arith.constant 0 : i32
    %c0_i32_0 = arith.constant 0 : i32
    %c0_i32_1 = arith.constant 0 : i32
    return %c0_i32, %c0_i32_0 : i32, i32
  }
  func.func @transform_17(%arg0: i32) -> (i32, i32, i32) {
    %c0_i32 = arith.constant 0 : i32
    %c0_i32_0 = arith.constant 0 : i32
    %c0_i32_1 = arith.constant 0 : i32
    return %arg0, %c0_i32, %c0_i32_0 : i32, i32, i32
  }
}

</mosaic_0001>

<llo_original>
// kernel: autoencoder_forward.1
$region0: #{autoencoder_forward.1}
  #allocation0 [shape = 'u32[]', space=smem, size = 0x4, offset = 0x4, fixed_abs, tag = 'smem constant byte address 0x4 - core index']
  #allocation1 [shape = 'u32[72,128]{1,0:T(1,128)}', space=vmem, size = 0x9000, scoped, tag = 'internal scratch']
  %s0 = inlined_call_operand.vmem [shape: f32[2,8,256], index: 0, kind: input, shape index: {}]
  %s1 = inlined_call_operand.vmem [shape: f32[16,128], index: 1, kind: input, shape index: {}]
  %s2 = inlined_call_operand.vmem [shape: f32[16,1], index: 2, kind: input, shape index: {}]
  %s3 = inlined_call_operand.hbm [shape: f32[24,144], index: 3, kind: input, shape index: {}]
  %s4 = inlined_call_operand.vmem [shape: f32[24,1], index: 4, kind: input, shape index: {}]
  %s5 = inlined_call_operand.vmem [shape: f32[16,216], index: 5, kind: input, shape index: {}]
  %s6 = inlined_call_operand.vmem [shape: f32[16,1], index: 6, kind: input, shape index: {}]
  %s7 = inlined_call_operand.vmem [shape: f32[8,144], index: 7, kind: input, shape index: {}]
  %s8 = inlined_call_operand.vmem [shape: f32[8,1], index: 8, kind: input, shape index: {}]
  %s9 = inlined_call_operand.hbm [shape: f32[8,200], index: 9, kind: input, shape index: {}]
  %s10 = inlined_call_operand.vmem [shape: f32[8,1], index: 10, kind: input, shape index: {}]
  %s11 = inlined_call_operand.hbm [shape: f32[188,36], index: 11, kind: input, shape index: {}]
  %s12 = inlined_call_operand.hbm [shape: f32[15,4], index: 12, kind: input, shape index: {}]
  %s13 = inlined_call_operand.vmem [shape: f32[4,49], index: 13, kind: input, shape index: {}]
  %s14 = inlined_call_operand.vmem [shape: f32[33,169], index: 14, kind: input, shape index: {}]
  %s15 = inlined_call_operand.hbm [shape: f32[141,361], index: 15, kind: input, shape index: {}]
  %s16 = inlined_call_operand.vmem [shape: f32[281,225], index: 16, kind: input, shape index: {}]
  %s17 = inlined_call_operand.vmem [shape: f32[2,8,225], index: 17, kind: output, shape index: {}]
  %s18 = sld [smem:[#allocation0]]
  $region121: #{autoencoder_forward.1} parent=0
    _
  %s20 = ssub.s32 1, %s18
  %s21 = scalar_select 0, %s20, %s18
  $region1: #{autoencoder_forward.1} parent=0
    #allocation2 [shape = 'u8[24576]{0}', space=vmem, size = 0x6000, scoped, tag = 'input window, operand 3, single buffered']
    #allocation3 [shape = 's32[2]{0}', space=sflag, size = 0x8, scoped, tag = 'scoped memory for autoencoder_forward.1']
    #allocation4 [shape = 'u8[8192]{0}', space=vmem, size = 0x2000, scoped, tag = 'input window, operand 9, single buffered']
    #allocation5 [shape = 's32[1]{0}', space=sflag, size = 0x4, scoped, tag = 'scoped memory for autoencoder_forward.1']
    #allocation6 [shape = 'u8[98304]{0}', space=vmem, size = 0x18000, scoped, tag = 'input window, operand 11, single buffered']
    #allocation7 [shape = 'u8[8192]{0}', space=vmem, size = 0x2000, scoped, tag = 'input window, operand 12, single buffered']
    #allocation8 [shape = 's32[1]{0}', space=sflag, size = 0x4, scoped, tag = 'scoped memory for autoencoder_forward.1']
    #allocation9 [shape = 'u8[221184]{0}', space=vmem, size = 0x36000, scoped, tag = 'input window, operand 15, single buffered']
    %22 = vsyncpa [#allocation3], 0
    %23 = vsyncpa [#allocation5], 0
    %24 = vsyncpa [#allocation8], 0
    loop: start=0, step=1, limit=4
    $region2: #{autoencoder_forward.1} parent=1 // loop_pre_header
      _
    $region3: #{autoencoder_forward.1} parent=1 // loop_header
      %s26 = sphi 0, %s30
      %p27 = scmp.ge.s32.totalorder %s26, 4
      %s36 = sphi 0, %s38
      %s39 = sphi 0, %s36
      %s40 = sphi 0, %s39
      %s56 = sphi 0, %s40
      %s60 = sphi 0, %s60
      %s62 = sphi 0, %s60
      %s63 = sphi 0, %s62
      %s77 = sphi 0, %s63
      %s81 = sphi 0, %s81
      %s83 = sphi 0, %s81
      %s84 = sphi 0, %s83
      %s98 = sphi 0, %s84
      %s102 = sphi 0, %s102
      %s104 = sphi 0, %s102
      %s105 = sphi 0, %s104
      %s119 = sphi 0, %s105
      %s123 = sphi 0, %s123
      %s125 = sphi 0, %s123
      %s126 = sphi 0, %s125
      %s140 = sphi 0, %s126
      %s144 = sphi 0, %s144
      %s146 = sphi 0, %s144
      %s147 = sphi 0, %s146
      %s161 = sphi 0, %s147
      %s165 = sphi 0, %s165
      %s167 = sphi 0, %s165
      %s168 = sphi 0, %s167
      %s182 = sphi 0, %s168
      %s186 = sphi 0, %s186
      %s188 = sphi 0, %s186
      %s189 = sphi 0, %s188
      %s203 = sphi 0, %s189
      %s207 = sphi 0, %s207
      %s209 = sphi 0, %s207
      %s210 = sphi 0, %s209
      %s224 = sphi 0, %s210
      %s228 = sphi 0, %s228
      %s230 = sphi 0, %s228
      %s231 = sphi 0, %s230
      %s245 = sphi 0, %s231
      %s249 = sphi 0, %s249
      %s251 = sphi 0, %s249
      %s252 = sphi 0, %s251
      %s266 = sphi 0, %s252
      %s270 = sphi 0, %s270
      %s272 = sphi 0, %s270
      %s273 = sphi 0, %s272
      %s287 = sphi 0, %s273
      %s291 = sphi 0, %s291
      %s293 = sphi 0, %s291
      %s294 = sphi 0, %s293
      %s308 = sphi 0, %s294
      %s312 = sphi 0, %s312
      %s314 = sphi 0, %s312
      %s315 = sphi 0, %s314
      %s329 = sphi 0, %s315
      %s333 = sphi 0, %s333
      %s335 = sphi 0, %s333
      %s336 = sphi 0, %s335
      %s350 = sphi 0, %s336
      %s354 = sphi 0, %s354
      %s356 = sphi 0, %s354
      %s357 = sphi 0, %s356
      %s371 = sphi 0, %s357
      %s375 = sphi 0, %s375
      %s377 = sphi 0, %s375
      %s378 = sphi 0, %s377
      %s392 = sphi 0, %s378
      %s398 = sphi 0, %s400
      %s401 = sphi 0, %s398
      %s402 = sphi 0, %s401
      %s418 = sphi 0, %s402
    $region4: #{autoencoder_forward.1} parent=1 // loop_header_branch
      %29 = sbr.rel (%p27) target = $region8
    $region5: #{autoencoder_forward.1} parent=1 // loop_body
      %s31 = ssub.s32 %s26, 1
      %s32 = ssub.s32 %s26, 2
      %s33 = sadd.s32 %s26, 1
      %s34 = ssub.s32 %s26, %s33
      %p35 = scmp.eq.s32.totalorder %s34, 0
      %s37 = sadd.s32 %s36, 1
      %s38 = scalar_select %p35, %s36, %s37
      %p41 = pneg %p35
      %p42 = scmp.eq.s32.totalorder %s26, 1
      %p43 = por %p41, %p42
      %p44 = scmp.ne.s32.totalorder %s36, %s39
      %p45 = scmp.eq.s32.totalorder %s26, 0
      %p46 = por %p44, %p45
      %p47 = scmp.ne.s32.totalorder %s36, %s39
      %p48 = scmp.eq.s32.totalorder %s31, 1
      %p49 = por %p47, %p48
      %p50 = scmp.ne.s32.totalorder %s39, %s40
      %p51 = scmp.eq.s32.totalorder %s31, 0
      %p52 = por %p50, %p51
      %p53 = scmp.ne.s32.totalorder %s39, %s40
      %p54 = scmp.eq.s32.totalorder %s32, 1
      %p55 = por %p53, %p54
      %p57 = scmp.ne.s32.totalorder %s40, %s56
      %p58 = scmp.eq.s32.totalorder %s32, 0
      %p59 = por %p57, %p58
      %s61 = sadd.s32 %s60, 1
      %p64 = scmp.eq.s32.totalorder %s26, 1
      %p65 = scmp.ne.s32.totalorder %s60, %s62
      %p66 = scmp.eq.s32.totalorder %s26, 0
      %p67 = por %p65, %p66
      %p68 = scmp.ne.s32.totalorder %s60, %s62
      %p69 = scmp.eq.s32.totalorder %s31, 1
      %p70 = por %p68, %p69
      %p71 = scmp.ne.s32.totalorder %s62, %s63
      %p72 = scmp.eq.s32.totalorder %s31, 0
      %p73 = por %p71, %p72
      %p74 = scmp.ne.s32.totalorder %s62, %s63
      %p75 = scmp.eq.s32.totalorder %s32, 1
      %p76 = por %p74, %p75
      %p78 = scmp.ne.s32.totalorder %s63, %s77
      %p79 = scmp.eq.s32.totalorder %s32, 0
      %p80 = por %p78, %p79
      %s82 = sadd.s32 %s81, 1
      %p85 = scmp.eq.s32.totalorder %s26, 1
      %p86 = scmp.ne.s32.totalorder %s81, %s83
      %p87 = scmp.eq.s32.totalorder %s26, 0
      %p88 = por %p86, %p87
      %p89 = scmp.ne.s32.totalorder %s81, %s83
      %p90 = scmp.eq.s32.totalorder %s31, 1
      %p91 = por %p89, %p90
      %p92 = scmp.ne.s32.totalorder %s83, %s84
      %p93 = scmp.eq.s32.totalorder %s31, 0
      %p94 = por %p92, %p93
      %p95 = scmp.ne.s32.totalorder %s83, %s84
      %p96 = scmp.eq.s32.totalorder %s32, 1
      %p97 = por %p95, %p96
      %p99 = scmp.ne.s32.totalorder %s84, %s98
      %p100 = scmp.eq.s32.totalorder %s32, 0
      %p101 = por %p99, %p100
      %s103 = sadd.s32 %s102, 1
      %p106 = scmp.eq.s32.totalorder %s26, 1
      %p107 = scmp.ne.s32.totalorder %s102, %s104
      %p108 = scmp.eq.s32.totalorder %s26, 0
      %p109 = por %p107, %p108
      %p110 = scmp.ne.s32.totalorder %s102, %s104
      %p111 = scmp.eq.s32.totalorder %s31, 1
      %p112 = por %p110, %p111
      %p113 = scmp.ne.s32.totalorder %s104, %s105
      %p114 = scmp.eq.s32.totalorder %s31, 0
      %p115 = por %p113, %p114
      %p116 = scmp.ne.s32.totalorder %s104, %s105
      %p117 = scmp.eq.s32.totalorder %s32, 1
      %p118 = por %p116, %p117
      %p120 = scmp.ne.s32.totalorder %s105, %s119
      %p121 = scmp.eq.s32.totalorder %s32, 0
      %p122 = por %p120, %p121
      %s124 = sadd.s32 %s123, 1
      %p127 = scmp.eq.s32.totalorder %s26, 1
      %p128 = scmp.ne.s32.totalorder %s123, %s125
      %p129 = scmp.eq.s32.totalorder %s26, 0
      %p130 = por %p128, %p129
      %p131 = scmp.ne.s32.totalorder %s123, %s125
      %p132 = scmp.eq.s32.totalorder %s31, 1
      %p133 = por %p131, %p132
      %p134 = scmp.ne.s32.totalorder %s125, %s126
      %p135 = scmp.eq.s32.totalorder %s31, 0
      %p136 = por %p134, %p135
      %p137 = scmp.ne.s32.totalorder %s125, %s126
      %p138 = scmp.eq.s32.totalorder %s32, 1
      %p139 = por %p137, %p138
      %p141 = scmp.ne.s32.totalorder %s126, %s140
      %p142 = scmp.eq.s32.totalorder %s32, 0
      %p143 = por %p141, %p142
      %s145 = sadd.s32 %s144, 1
      %p148 = scmp.eq.s32.totalorder %s26, 1
      %p149 = scmp.ne.s32.totalorder %s144, %s146
      %p150 = scmp.eq.s32.totalorder %s26, 0
      %p151 = por %p149, %p150
      %p152 = scmp.ne.s32.totalorder %s144, %s146
      %p153 = scmp.eq.s32.totalorder %s31, 1
      %p154 = por %p152, %p153
      %p155 = scmp.ne.s32.totalorder %s146, %s147
      %p156 = scmp.eq.s32.totalorder %s31, 0
      %p157 = por %p155, %p156
      %p158 = scmp.ne.s32.totalorder %s146, %s147
      %p159 = scmp.eq.s32.totalorder %s32, 1
      %p160 = por %p158, %p159
      %p162 = scmp.ne.s32.totalorder %s147, %s161
      %p163 = scmp.eq.s32.totalorder %s32, 0
      %p164 = por %p162, %p163
      %s166 = sadd.s32 %s165, 1
      %p169 = scmp.eq.s32.totalorder %s26, 1
      %p170 = scmp.ne.s32.totalorder %s165, %s167
      %p171 = scmp.eq.s32.totalorder %s26, 0
      %p172 = por %p170, %p171
      %p173 = scmp.ne.s32.totalorder %s165, %s167
      %p174 = scmp.eq.s32.totalorder %s31, 1
      %p175 = por %p173, %p174
      %p176 = scmp.ne.s32.totalorder %s167, %s168
      %p177 = scmp.eq.s32.totalorder %s31, 0
      %p178 = por %p176, %p177
      %p179 = scmp.ne.s32.totalorder %s167, %s168
      %p180 = scmp.eq.s32.totalorder %s32, 1
      %p181 = por %p179, %p180
      %p183 = scmp.ne.s32.totalorder %s168, %s182
      %p184 = scmp.eq.s32.totalorder %s32, 0
      %p185 = por %p183, %p184
      %s187 = sadd.s32 %s186, 1
      %p190 = scmp.eq.s32.totalorder %s26, 1
      %p191 = scmp.ne.s32.totalorder %s186, %s188
      %p192 = scmp.eq.s32.totalorder %s26, 0
      %p193 = por %p191, %p192
      %p194 = scmp.ne.s32.totalorder %s186, %s188
      %p195 = scmp.eq.s32.totalorder %s31, 1
      %p196 = por %p194, %p195
      %p197 = scmp.ne.s32.totalorder %s188, %s189
      %p198 = scmp.eq.s32.totalorder %s31, 0
      %p199 = por %p197, %p198
      %p200 = scmp.ne.s32.totalorder %s188, %s189
      %p201 = scmp.eq.s32.totalorder %s32, 1
      %p202 = por %p200, %p201
      %p204 = scmp.ne.s32.totalorder %s189, %s203
      %p205 = scmp.eq.s32.totalorder %s32, 0
      %p206 = por %p204, %p205
      %s208 = sadd.s32 %s207, 1
      %p211 = scmp.eq.s32.totalorder %s26, 1
      %p212 = scmp.ne.s32.totalorder %s207, %s209
      %p213 = scmp.eq.s32.totalorder %s26, 0
      %p214 = por %p212, %p213
      %p215 = scmp.ne.s32.totalorder %s207, %s209
      %p216 = scmp.eq.s32.totalorder %s31, 1
      %p217 = por %p215, %p216
      %p218 = scmp.ne.s32.totalorder %s209, %s210
      %p219 = scmp.eq.s32.totalorder %s31, 0
      %p220 = por %p218, %p219
      %p221 = scmp.ne.s32.totalorder %s209, %s210
      %p222 = scmp.eq.s32.totalorder %s32, 1
      %p223 = por %p221, %p222
      %p225 = scmp.ne.s32.totalorder %s210, %s224
      %p226 = scmp.eq.s32.totalorder %s32, 0
      %p227 = por %p225, %p226
      %s229 = sadd.s32 %s228, 1
      %p232 = scmp.eq.s32.totalorder %s26, 1
      %p233 = scmp.ne.s32.totalorder %s228, %s230
      %p234 = scmp.eq.s32.totalorder %s26, 0
      %p235 = por %p233, %p234
      %p236 = scmp.ne.s32.totalorder %s228, %s230
      %p237 = scmp.eq.s32.totalorder %s31, 1
      %p238 = por %p236, %p237
      %p239 = scmp.ne.s32.totalorder %s230, %s231
      %p240 = scmp.eq.s32.totalorder %s31, 0
      %p241 = por %p239, %p240
      %p242 = scmp.ne.s32.totalorder %s230, %s231
      %p243 = scmp.eq.s32.totalorder %s32, 1
      %p244 = por %p242, %p243
      %p246 = scmp.ne.s32.totalorder %s231, %s245
      %p247 = scmp.eq.s32.totalorder %s32, 0
      %p248 = por %p246, %p247
      %s250 = sadd.s32 %s249, 1
      %p253 = scmp.eq.s32.totalorder %s26, 1
      %p254 = scmp.ne.s32.totalorder %s249, %s251
      %p255 = scmp.eq.s32.totalorder %s26, 0
      %p256 = por %p254, %p255
      %p257 = scmp.ne.s32.totalorder %s249, %s251
      %p258 = scmp.eq.s32.totalorder %s31, 1
      %p259 = por %p257, %p258
      %p260 = scmp.ne.s32.totalorder %s251, %s252
      %p261 = scmp.eq.s32.totalorder %s31, 0
      %p262 = por %p260, %p261
      %p263 = scmp.ne.s32.totalorder %s251, %s252
      %p264 = scmp.eq.s32.totalorder %s32, 1
      %p265 = por %p263, %p264
      %p267 = scmp.ne.s32.totalorder %s252, %s266
      %p268 = scmp.eq.s32.totalorder %s32, 0
      %p269 = por %p267, %p268
      %s271 = sadd.s32 %s270, 1
      %p274 = scmp.eq.s32.totalorder %s26, 1
      %p275 = scmp.ne.s32.totalorder %s270, %s272
      %p276 = scmp.eq.s32.totalorder %s26, 0
      %p277 = por %p275, %p276
      %p278 = scmp.ne.s32.totalorder %s270, %s272
      %p279 = scmp.eq.s32.totalorder %s31, 1
      %p280 = por %p278, %p279
      %p281 = scmp.ne.s32.totalorder %s272, %s273
      %p282 = scmp.eq.s32.totalorder %s31, 0
      %p283 = por %p281, %p282
      %p284 = scmp.ne.s32.totalorder %s272, %s273
      %p285 = scmp.eq.s32.totalorder %s32, 1
      %p286 = por %p284, %p285
      %p288 = scmp.ne.s32.totalorder %s273, %s287
      %p289 = scmp.eq.s32.totalorder %s32, 0
      %p290 = por %p288, %p289
      %s292 = sadd.s32 %s291, 1
      %p295 = scmp.eq.s32.totalorder %s26, 1
      %p296 = scmp.ne.s32.totalorder %s291, %s293
      %p297 = scmp.eq.s32.totalorder %s26, 0
      %p298 = por %p296, %p297
      %p299 = scmp.ne.s32.totalorder %s291, %s293
      %p300 = scmp.eq.s32.totalorder %s31, 1
      %p301 = por %p299, %p300
      %p302 = scmp.ne.s32.totalorder %s293, %s294
      %p303 = scmp.eq.s32.totalorder %s31, 0
      %p304 = por %p302, %p303
      %p305 = scmp.ne.s32.totalorder %s293, %s294
      %p306 = scmp.eq.s32.totalorder %s32, 1
      %p307 = por %p305, %p306
      %p309 = scmp.ne.s32.totalorder %s294, %s308
      %p310 = scmp.eq.s32.totalorder %s32, 0
      %p311 = por %p309, %p310
      %s313 = sadd.s32 %s312, 1
      %p316 = scmp.eq.s32.totalorder %s26, 1
      %p317 = scmp.ne.s32.totalorder %s312, %s314
      %p318 = scmp.eq.s32.totalorder %s26, 0
      %p319 = por %p317, %p318
      %p320 = scmp.ne.s32.totalorder %s312, %s314
      %p321 = scmp.eq.s32.totalorder %s31, 1
      %p322 = por %p320, %p321
      %p323 = scmp.ne.s32.totalorder %s314, %s315
      %p324 = scmp.eq.s32.totalorder %s31, 0
      %p325 = por %p323, %p324
      %p326 = scmp.ne.s32.totalorder %s314, %s315
      %p327 = scmp.eq.s32.totalorder %s32, 1
      %p328 = por %p326, %p327
      %p330 = scmp.ne.s32.totalorder %s315, %s329
      %p331 = scmp.eq.s32.totalorder %s32, 0
      %p332 = por %p330, %p331
      %s334 = sadd.s32 %s333, 1
      %p337 = scmp.eq.s32.totalorder %s26, 1
      %p338 = scmp.ne.s32.totalorder %s333, %s335
      %p339 = scmp.eq.s32.totalorder %s26, 0
      %p340 = por %p338, %p339
      %p341 = scmp.ne.s32.totalorder %s333, %s335
      %p342 = scmp.eq.s32.totalorder %s31, 1
      %p343 = por %p341, %p342
      %p344 = scmp.ne.s32.totalorder %s335, %s336
      %p345 = scmp.eq.s32.totalorder %s31, 0
      %p346 = por %p344, %p345
      %p347 = scmp.ne.s32.totalorder %s335, %s336
      %p348 = scmp.eq.s32.totalorder %s32, 1
      %p349 = por %p347, %p348
      %p351 = scmp.ne.s32.totalorder %s336, %s350
      %p352 = scmp.eq.s32.totalorder %s32, 0
      %p353 = por %p351, %p352
      %s355 = sadd.s32 %s354, 1
      %p358 = scmp.eq.s32.totalorder %s26, 1
      %p359 = scmp.ne.s32.totalorder %s354, %s356
      %p360 = scmp.eq.s32.totalorder %s26, 0
      %p361 = por %p359, %p360
      %p362 = scmp.ne.s32.totalorder %s354, %s356
      %p363 = scmp.eq.s32.totalorder %s31, 1
      %p364 = por %p362, %p363
      %p365 = scmp.ne.s32.totalorder %s356, %s357
      %p366 = scmp.eq.s32.totalorder %s31, 0
      %p367 = por %p365, %p366
      %p368 = scmp.ne.s32.totalorder %s356, %s357
      %p369 = scmp.eq.s32.totalorder %s32, 1
      %p370 = por %p368, %p369
      %p372 = scmp.ne.s32.totalorder %s357, %s371
      %p373 = scmp.eq.s32.totalorder %s32, 0
      %p374 = por %p372, %p373
      %s376 = sadd.s32 %s375, 1
      %p379 = scmp.eq.s32.totalorder %s26, 1
      %p380 = scmp.ne.s32.totalorder %s375, %s377
      %p381 = scmp.eq.s32.totalorder %s26, 0
      %p382 = por %p380, %p381
      %p383 = scmp.ne.s32.totalorder %s375, %s377
      %p384 = scmp.eq.s32.totalorder %s31, 1
      %p385 = por %p383, %p384
      %p386 = scmp.ne.s32.totalorder %s377, %s378
      %p387 = scmp.eq.s32.totalorder %s31, 0
      %p388 = por %p386, %p387
      %p389 = scmp.ne.s32.totalorder %s377, %s378
      %p390 = scmp.eq.s32.totalorder %s32, 1
      %p391 = por %p389, %p390
      %p393 = scmp.ne.s32.totalorder %s378, %s392
      %p394 = scmp.eq.s32.totalorder %s32, 0
      %p395 = por %p393, %p394
      %s396 = ssub.s32 %s26, %s33
      %p397 = scmp.eq.s32.totalorder %s396, 0
      %s399 = sadd.s32 %s398, 1
      %s400 = scalar_select %p397, %s398, %s399
      %p403 = pneg %p397
      %p404 = scmp.eq.s32.totalorder %s26, 1
      %p405 = por %p403, %p404
      %p406 = scmp.ne.s32.totalorder %s398, %s401
      %p407 = scmp.eq.s32.totalorder %s26, 0
      %p408 = por %p406, %p407
      %p409 = scmp.ne.s32.totalorder %s398, %s401
      %p410 = scmp.eq.s32.totalorder %s31, 1
      %p411 = por %p409, %p410
      %p412 = scmp.ne.s32.totalorder %s401, %s402
      %p413 = scmp.eq.s32.totalorder %s31, 0
      %p414 = por %p412, %p413
      %p415 = scmp.ne.s32.totalorder %s401, %s402
      %p416 = scmp.eq.s32.totalorder %s32, 1
      %p417 = por %p415, %p416
      %p419 = scmp.ne.s32.totalorder %s402, %s418
      %p420 = scmp.eq.s32.totalorder %s32, 0
      %p421 = por %p419, %p420
      %p422 = scmp.le.s32.totalorder 1, %s26
      %p423 = scmp.lt.s32.totalorder %s26, 3
      %p424 = pnand %p422, %p423
      %p425 = pneg %p424
      // Predicated region
      $region9: #{autoencoder_forward.1} parent=5 // pred_check
        _
      $region10: #{autoencoder_forward.1} parent=5 // pred_check_branch
        %427 = sbr.rel (%p424) target = $region12
      $region11: #{autoencoder_forward.1} parent=5 // pred_region
        %s428 = ssub.s32 %s26, 1
        // Predicated region
        $region13: #{autoencoder_forward.1} parent=11 // pred_check
          %p429 = pneg %p73
        $region14: #{autoencoder_forward.1} parent=11 // pred_check_branch
          %431 = sbr.rel (%p429) target = $region16
        $region15: #{autoencoder_forward.1} parent=11 // pred_region
          _
        $region16: #{autoencoder_forward.1} parent=11 // pred_fallthru
          _
        // Predicated region
        $region17: #{autoencoder_forward.1} parent=11 // pred_check
          %p432 = pneg %p94
        $region18: #{autoencoder_forward.1} parent=11 // pred_check_branch
          %434 = sbr.rel (%p432) target = $region20
        $region19: #{autoencoder_forward.1} parent=11 // pred_region
          _
        $region20: #{autoencoder_forward.1} parent=11 // pred_fallthru
          _
        // Predicated region
        $region21: #{autoencoder_forward.1} parent=11 // pred_check
          %p435 = pneg %p115
        $region22: #{autoencoder_forward.1} parent=11 // pred_check_branch
          %437 = sbr.rel (%p435) target = $region24
        $region23: #{autoencoder_forward.1} parent=11 // pred_region
          %439 = vsyncadd [#allocation3], 0
          %s440 = sshll.u32 %s3, 4
          %s441 = int_to_ptr.hbm [resolvable:$true] %s440
          %s442 = sshll.u32 [#allocation2], 4
          %s443 = int_to_ptr.vmem [resolvable:$true] %s442
          %448 = dma.hbm_to_vmem [thread:$0]  %s441, 768, %s443, [#allocation3], 256, 256, 16
        $region24: #{autoencoder_forward.1} parent=11 // pred_fallthru
          _
        // Predicated region
        $region25: #{autoencoder_forward.1} parent=11 // pred_check
          %p449 = pneg %p136
        $region26: #{autoencoder_forward.1} parent=11 // pred_check_branch
          %451 = sbr.rel (%p449) target = $region28
        $region27: #{autoencoder_forward.1} parent=11 // pred_region
          _
        $region28: #{autoencoder_forward.1} parent=11 // pred_fallthru
          _
        // Predicated region
        $region29: #{autoencoder_forward.1} parent=11 // pred_check
          %p452 = pneg %p157
        $region30: #{autoencoder_forward.1} parent=11 // pred_check_branch
          %454 = sbr.rel (%p452) target = $region32
        $region31: #{autoencoder_forward.1} parent=11 // pred_region
          _
        $region32: #{autoencoder_forward.1} parent=11 // pred_fallthru
          _
        // Predicated region
        $region33: #{autoencoder_forward.1} parent=11 // pred_check
          %p455 = pneg %p178
        $region34: #{autoencoder_forward.1} parent=11 // pred_check_branch
          %457 = sbr.rel (%p455) target = $region36
        $region35: #{autoencoder_forward.1} parent=11 // pred_region
          _
        $region36: #{autoencoder_forward.1} parent=11 // pred_fallthru
          _
        // Predicated region
        $region37: #{autoencoder_forward.1} parent=11 // pred_check
          %p458 = pneg %p199
        $region38: #{autoencoder_forward.1} parent=11 // pred_check_branch
          %460 = sbr.rel (%p458) target = $region40
        $region39: #{autoencoder_forward.1} parent=11 // pred_region
          _
        $region40: #{autoencoder_forward.1} parent=11 // pred_fallthru
          _
        // Predicated region
        $region41: #{autoencoder_forward.1} parent=11 // pred_check
          %p461 = pneg %p220
        $region42: #{autoencoder_forward.1} parent=11 // pred_check_branch
          %463 = sbr.rel (%p461) target = $region44
        $region43: #{autoencoder_forward.1} parent=11 // pred_region
          _
        $region44: #{autoencoder_forward.1} parent=11 // pred_fallthru
          _
        // Predicated region
        $region45: #{autoencoder_forward.1} parent=11 // pred_check
          %p464 = pneg %p241
        $region46: #{autoencoder_forward.1} parent=11 // pred_check_branch
          %466 = sbr.rel (%p464) target = $region48
        $region47: #{autoencoder_forward.1} parent=11 // pred_region
          %468 = vsyncadd [#allocation5], 0
          %s470 = sshll.u32 %s9, 4
          %s471 = int_to_ptr.hbm [resolvable:$true] %s470
          %s472 = sshll.u32 [#allocation4], 4
          %s473 = int_to_ptr.vmem [resolvable:$true] %s472
          %475 = dma.hbm_to_vmem [thread:$0]  %s471, 256, %s473, [#allocation5]
        $region48: #{autoencoder_forward.1} parent=11 // pred_fallthru
          _
        // Predicated region
        $region49: #{autoencoder_forward.1} parent=11 // pred_check
          %p476 = pneg %p262
        $region50: #{autoencoder_forward.1} parent=11 // pred_check_branch
          %478 = sbr.rel (%p476) target = $region52
        $region51: #{autoencoder_forward.1} parent=11 // pred_region
          _
        $region52: #{autoencoder_forward.1} parent=11 // pred_fallthru
          _
        // Predicated region
        $region53: #{autoencoder_forward.1} parent=11 // pred_check
          %p479 = pneg %p283
        $region54: #{autoencoder_forward.1} parent=11 // pred_check_branch
          %481 = sbr.rel (%p479) target = $region56
        $region55: #{autoencoder_forward.1} parent=11 // pred_region
          %483 = vsyncadd [#allocation5], 0
          %s484 = sshll.u32 %s11, 4
          %s485 = int_to_ptr.hbm [resolvable:$true] %s484
          %s486 = sshll.u32 [#allocation6], 4
          %s487 = int_to_ptr.vmem [resolvable:$true] %s486
          %492 = dma.hbm_to_vmem [thread:$0]  %s485, 3072, %s487, [#allocation5], 128, 128, 8
        $region56: #{autoencoder_forward.1} parent=11 // pred_fallthru
          _
        // Predicated region
        $region57: #{autoencoder_forward.1} parent=11 // pred_check
          %p493 = pneg %p304
        $region58: #{autoencoder_forward.1} parent=11 // pred_check_branch
          %495 = sbr.rel (%p493) target = $region60
        $region59: #{autoencoder_forward.1} parent=11 // pred_region
          %497 = vsyncadd [#allocation8], 0
          %s498 = sshll.u32 %s12, 4
          %s499 = int_to_ptr.hbm [resolvable:$true] %s498
          %s500 = sshll.u32 [#allocation7], 4
          %s501 = int_to_ptr.vmem [resolvable:$true] %s500
          %506 = dma.hbm_to_vmem [thread:$0]  %s499, 256, %s501, [#allocation8], 128, 128, 8
        $region60: #{autoencoder_forward.1} parent=11 // pred_fallthru
          _
        // Predicated region
        $region61: #{autoencoder_forward.1} parent=11 // pred_check
          %p507 = pneg %p325
        $region62: #{autoencoder_forward.1} parent=11 // pred_check_branch
          %509 = sbr.rel (%p507) target = $region64
        $region63: #{autoencoder_forward.1} parent=11 // pred_region
          _
        $region64: #{autoencoder_forward.1} parent=11 // pred_fallthru
          _
        // Predicated region
        $region65: #{autoencoder_forward.1} parent=11 // pred_check
          %p510 = pneg %p346
        $region66: #{autoencoder_forward.1} parent=11 // pred_check_branch
          %512 = sbr.rel (%p510) target = $region68
        $region67: #{autoencoder_forward.1} parent=11 // pred_region
          _
        $region68: #{autoencoder_forward.1} parent=11 // pred_fallthru
          _
        // Predicated region
        $region69: #{autoencoder_forward.1} parent=11 // pred_check
          %p513 = pneg %p367
        $region70: #{autoencoder_forward.1} parent=11 // pred_check_branch
          %515 = sbr.rel (%p513) target = $region72
        $region71: #{autoencoder_forward.1} parent=11 // pred_region
          %517 = vsyncadd [#allocation8], 0
          %s518 = sshll.u32 %s15, 4
          %s519 = int_to_ptr.hbm [resolvable:$true] %s518
          %s520 = sshll.u32 [#allocation9], 4
          %s521 = int_to_ptr.vmem [resolvable:$true] %s520
          %526 = dma.hbm_to_vmem [thread:$0]  %s519, 6912, %s521, [#allocation8], 384, 384, 24
        $region72: #{autoencoder_forward.1} parent=11 // pred_fallthru
          _
        // Predicated region
        $region73: #{autoencoder_forward.1} parent=11 // pred_check
          %p527 = pneg %p388
        $region74: #{autoencoder_forward.1} parent=11 // pred_check_branch
          %529 = sbr.rel (%p527) target = $region76
        $region75: #{autoencoder_forward.1} parent=11 // pred_region
          _
        $region76: #{autoencoder_forward.1} parent=11 // pred_fallthru
          _
      $region12: #{autoencoder_forward.1} parent=5 // pred_fallthru
        _
      %p530 = scmp.lt.s32.totalorder %s26, 2
      // Predicated region
      $region77: #{autoencoder_forward.1} parent=5 // pred_check
        %p531 = pneg %p530
      $region78: #{autoencoder_forward.1} parent=5 // pred_check_branch
        %533 = sbr.rel (%p531) target = $region80
      $region79: #{autoencoder_forward.1} parent=5 // pred_region
        // Predicated region
        $region81: #{autoencoder_forward.1} parent=79 // pred_check
          %p534 = pneg %p46
        $region82: #{autoencoder_forward.1} parent=79 // pred_check_branch
          %536 = sbr.rel (%p534) target = $region84
        $region83: #{autoencoder_forward.1} parent=79 // pred_region
          %p537 = scmp.lt.s32.totalorder %s26, 1
          %s538 = scalar_select %p537, %s26, 1
          %s539 = smul.addr %s538, 2
          %s540 = smul.addr %s539, 8
          %s541 = scalar_lea.vmem %s0, %s540
        $region84: #{autoencoder_forward.1} parent=79 // pred_fallthru
          _
      $region80: #{autoencoder_forward.1} parent=5 // pred_fallthru
        _
      %p542 = scmp.le.s32.totalorder 1, %s26
      %p543 = scmp.lt.s32.totalorder %s26, 3
      %p544 = pnand %p542, %p543
      %p545 = pneg %p544
      // Predicated region
      $region85: #{autoencoder_forward.1} parent=5 // pred_check
        _
      $region86: #{autoencoder_forward.1} parent=5 // pred_check_branch
        %547 = sbr.rel (%p544) target = $region88
      $region87: #{autoencoder_forward.1} parent=5 // pred_region
        %s548 = ssub.s32 %s26, 1
        // Predicated region
        $region89: #{autoencoder_forward.1} parent=87 // pred_check
          %p549 = pneg %p115
        $region90: #{autoencoder_forward.1} parent=87 // pred_check_branch
          %551 = sbr.rel (%p549) target = $region92
        $region91: #{autoencoder_forward.1} parent=87 // pred_region
          %553 = dma.done [#allocation3], 768
        $region92: #{autoencoder_forward.1} parent=87 // pred_fallthru
          _
        // Predicated region
        $region93: #{autoencoder_forward.1} parent=87 // pred_check
          %p554 = pneg %p241
        $region94: #{autoencoder_forward.1} parent=87 // pred_check_branch
          %556 = sbr.rel (%p554) target = $region96
        $region95: #{autoencoder_forward.1} parent=87 // pred_region
          %558 = dma.done [#allocation5], 256
        $region96: #{autoencoder_forward.1} parent=87 // pred_fallthru
          _
        // Predicated region
        $region97: #{autoencoder_forward.1} parent=87 // pred_check
          %p559 = pneg %p283
        $region98: #{autoencoder_forward.1} parent=87 // pred_check_branch
          %561 = sbr.rel (%p559) target = $region100
        $region99: #{autoencoder_forward.1} parent=87 // pred_region
          %563 = dma.done [#allocation5], 3072
        $region100: #{autoencoder_forward.1} parent=87 // pred_fallthru
          _
        // Predicated region
        $region101: #{autoencoder_forward.1} parent=87 // pred_check
          %p564 = pneg %p304
        $region102: #{autoencoder_forward.1} parent=87 // pred_check_branch
          %566 = sbr.rel (%p564) target = $region104
        $region103: #{autoencoder_forward.1} parent=87 // pred_region
          %568 = dma.done [#allocation8], 256
        $region104: #{autoencoder_forward.1} parent=87 // pred_fallthru
          _
        // Predicated region
        $region105: #{autoencoder_forward.1} parent=87 // pred_check
          %p569 = pneg %p367
        $region106: #{autoencoder_forward.1} parent=87 // pred_check_branch
          %571 = sbr.rel (%p569) target = $region108
        $region107: #{autoencoder_forward.1} parent=87 // pred_region
          %573 = dma.done [#allocation8], 6912
        $region108: #{autoencoder_forward.1} parent=87 // pred_fallthru
          _
        %p574 = scmp.lt.s32.totalorder %s31, 1
        %s575 = scalar_select %p574, %s31, 1
        %s576 = smul.addr %s575, 2
        %s577 = smul.addr %s576, 8
        %s578 = scalar_lea.vmem %s0, %s577
        %p579 = pneg %p52
        %p580 = pneg %p49
        %p581 = pneg %p73
        %p582 = pneg %p70
        %p583 = pneg %p94
        %p584 = pneg %p91
        %p585 = pneg %p115
        %p586 = pneg %p112
        %p587 = pneg %p136
        %p588 = pneg %p133
        %p589 = pneg %p157
        %p590 = pneg %p154
        %p591 = pneg %p178
        %p592 = pneg %p175
        %p593 = pneg %p199
        %p594 = pneg %p196
        %p595 = pneg %p220
        %p596 = pneg %p217
        %p597 = pneg %p241
        %p598 = pneg %p238
        %p599 = pneg %p262
        %p600 = pneg %p259
        %p601 = pneg %p283
        %p602 = pneg %p280
        %p603 = pneg %p304
        %p604 = pneg %p301
        %p605 = pneg %p325
        %p606 = pneg %p322
        %p607 = pneg %p346
        %p608 = pneg %p343
        %p609 = pneg %p367
        %p610 = pneg %p364
        %p611 = pneg %p388
        %p612 = pneg %p385
        %p613 = pneg %p414
        %p614 = pneg %p411
        %p615 = scmp.lt.s32.totalorder %s31, 1
        %s616 = scalar_select %p615, %s31, 1
        %s617 = smul.addr %s616, 2
        %s618 = smul.addr %s617, 8
        %s619 = scalar_lea.vmem %s17, %s618
        %p620 = scmp.lt.s32.totalorder %s31, 1
        %s621 = scalar_select %p620, %s31, 1
        %s622 = smul.addr %s621, 2
        %s623 = smul.addr %s622, 8
        %s624 = scalar_lea.vmem %s0, %s623
        %p625 = scmp.lt.s32.totalorder %s31, 1
        %s626 = scalar_select %p625, %s31, 1
        %s627 = smul.addr %s626, 2
        %s628 = smul.addr %s627, 8
        %s629 = scalar_lea.vmem %s17, %s628
        %v630 = vld [vmem:[%s624] sm:$0xff]
        %v631 = vld [vmem:[%s624 + $0x8] sm:$0xff]
        %v632 = vld [vmem:[%s1] sm:$0xff]
        %v633 = vld [vmem:[%s1 + $0x8] sm:$0xff]
        %v634 = vld [vmem:[%s2] sm:$0xff]
        %v635 = vld [vmem:[%s2 + $0x8] sm:$0xff]
        %638 = vrot.lane.b32.xlu0 %v630, 112
        %v639 = vpop.permute.xlu0 %638
        %640 = vrot.lane.b32.xlu0 %v631, 112
        %v641 = vpop.permute.xlu0 %640
        %vm642 = vcmask 916480
        %v643 = vsel %vm642, %v639, %v641
        %646 = vrot.lane.b32.xlu0 %v630, 96
        %v647 = vpop.permute.xlu0 %646
        %648 = vrot.lane.b32.xlu0 %v631, 96
        %v649 = vpop.permute.xlu0 %648
        %vm650 = vcmask 785408
        %v651 = vsel %vm650, %v647, %v649
        %654 = vrot.lane.b32.xlu0 %v630, 80
        %v655 = vpop.permute.xlu0 %654
        %656 = vrot.lane.b32.xlu0 %v631, 80
        %v657 = vpop.permute.xlu0 %656
        %vm658 = vcmask 654336
        %v659 = vsel %vm658, %v655, %v657
        %662 = vrot.lane.b32.xlu0 %v630, 127
        %v663 = vpop.permute.xlu0 %662
        %664 = vrot.lane.b32.xlu0 %v631, 127
        %v665 = vpop.permute.xlu0 %664
        %666 = vrot.lane.b32.xlu0 %v643, 127
        %v667 = vpop.permute.xlu0 %666
        %668 = vrot.lane.b32.xlu0 %v641, 127
        %v669 = vpop.permute.xlu0 %668
        %670 = vrot.lane.b32.xlu0 %v651, 127
        %v671 = vpop.permute.xlu0 %670
        %672 = vrot.lane.b32.xlu0 %v649, 127
        %v673 = vpop.permute.xlu0 %672
        %674 = vrot.lane.b32.xlu0 %v659, 127
        %v675 = vpop.permute.xlu0 %674
        %676 = vrot.lane.b32.xlu0 %v657, 127
        %v677 = vpop.permute.xlu0 %676
        %vm678 = vcmask 1039360
        %v679 = vsel %vm678, %v663, %v665
        %v680 = vsel %vm678, %v667, %v669
        %v681 = vsel %vm678, %v671, %v673
        %v682 = vsel %vm678, %v675, %v677
        %691 = vrot.lane.b32.xlu0 %v630, 126
        %v692 = vpop.permute.xlu0 %691
        %693 = vrot.lane.b32.xlu0 %v631, 126
        %v694 = vpop.permute.xlu0 %693
        %695 = vrot.lane.b32.xlu0 %v643, 126
        %v696 = vpop.permute.xlu0 %695
        %697 = vrot.lane.b32.xlu0 %v641, 126
        %v698 = vpop.permute.xlu0 %697
        %699 = vrot.lane.b32.xlu0 %v651, 126
        %v700 = vpop.permute.xlu0 %699
        %701 = vrot.lane.b32.xlu0 %v649, 126
        %v702 = vpop.permute.xlu0 %701
        %703 = vrot.lane.b32.xlu0 %v659, 126
        %v704 = vpop.permute.xlu0 %703
        %705 = vrot.lane.b32.xlu0 %v657, 126
        %v706 = vpop.permute.xlu0 %705
        %vm707 = vcmask 1031168
        %v708 = vsel %vm707, %v692, %v694
        %v709 = vsel %vm707, %v696, %v698
        %v710 = vsel %vm707, %v700, %v702
        %v711 = vsel %vm707, %v704, %v706
        %720 = vrot.lane.b32.xlu0 %v630, 125
        %v721 = vpop.permute.xlu0 %720
        %722 = vrot.lane.b32.xlu0 %v631, 125
        %v723 = vpop.permute.xlu0 %722
        %724 = vrot.lane.b32.xlu0 %v643, 125
        %v725 = vpop.permute.xlu0 %724
        %726 = vrot.lane.b32.xlu0 %v641, 125
        %v727 = vpop.permute.xlu0 %726
        %728 = vrot.lane.b32.xlu0 %v651, 125
        %v729 = vpop.permute.xlu0 %728
        %730 = vrot.lane.b32.xlu0 %v649, 125
        %v731 = vpop.permute.xlu0 %730
        %732 = vrot.lane.b32.xlu0 %v659, 125
        %v733 = vpop.permute.xlu0 %732
        %734 = vrot.lane.b32.xlu0 %v657, 125
        %v735 = vpop.permute.xlu0 %734
        %vm736 = vcmask 1022976
        %v737 = vsel %vm736, %v721, %v723
        %v738 = vsel %vm736, %v725, %v727
        %v739 = vsel %vm736, %v729, %v731
        %v740 = vsel %vm736, %v733, %v735
        %750 = vset.pattern.permute.xlu0 0
        %751 = vperm.xlu0 %750, %v634
        %v752 = vpop.permute.xlu0 %751
        %755 = vset.pattern.permute.xlu0 0
        %756 = vperm.xlu0 %755, %v635
        %v757 = vpop.permute.xlu0 %756
        %759 = vmatpush.msra.mxu0 %v740
        %760 = vmatpush.msra.mxu0 %v739
        %761 = vmatpush.msra.mxu0 %v738
        %762 = vmatpush.msra.mxu0 %v737
        %763 = vmatpush.msra.mxu0 %v711
        %764 = vmatpush.msra.mxu0 %v710
        %765 = vmatpush.msra.mxu0 %v709
        %766 = vmatpush.msra.mxu0 %v708
        %767 = vmatpush.msra.mxu0 %v682
        %768 = vmatpush.msra.mxu0 %v681
        %769 = vmatpush.msra.mxu0 %v680
        %770 = vmatpush.msra.mxu0 %v679
        %771 = vmatpush.msra.mxu0 %v659
        %772 = vmatpush.msra.mxu0 %v651
        %773 = vmatpush.msra.mxu0 %v643
        %774 = vmatpush.msra.mxu0 %v630
        %775 = vmatmul.f32.gmra.mxu0 %v632
        %v776 = vpop.f32.mrf.mxu0
        %v777 = vadd.f32 %v752, %v776
        %778 = vmatmul.f32.gmra.mxu0 %v633
        %v779 = vpop.f32.mrf.mxu0
        %v780 = vadd.f32 %v757, %v779
        %781 = vdwg.mxu0
        %782 = vmatpush.msra.mxu0 %v735
        %783 = vmatpush.msra.mxu0 %v731
        %784 = vmatpush.msra.mxu0 %v727
        %785 = vmatpush.msra.mxu0 %v723
        %786 = vmatpush.msra.mxu0 %v706
        %787 = vmatpush.msra.mxu0 %v702
        %788 = vmatpush.msra.mxu0 %v698
        %789 = vmatpush.msra.mxu0 %v694
        %790 = vmatpush.msra.mxu0 %v677
        %791 = vmatpush.msra.mxu0 %v673
        %792 = vmatpush.msra.mxu0 %v669
        %793 = vmatpush.msra.mxu0 %v665
        %794 = vmatpush.msra.mxu0 %v657
        %795 = vmatpush.msra.mxu0 %v649
        %796 = vmatpush.msra.mxu0 %v641
        %797 = vmatpush.msra.mxu0 %v631
        %798 = vmatmul.f32.gmra.mxu0 %v632
        %v799 = vpop.f32.mrf.mxu0
        %v800 = vadd.f32 %v752, %v799
        %801 = vmatmul.f32.gmra.mxu0 %v633
        %v802 = vpop.f32.mrf.mxu0
        %v803 = vadd.f32 %v757, %v802
        %804 = vdwg.mxu0
        %v805 = vmax.f32 %v777, 0.0
        %v806 = vmax.f32 %v800, 0.0
        %v807 = vmax.f32 %v780, 0.0
        %v808 = vmax.f32 %v803, 0.0
        %v809 = vld [vmem:[#allocation6] sm:$0xff]
        %v810 = vld [vmem:[#allocation6 + $0x8] sm:$0xff]
        %v811 = vld [vmem:[#allocation6 + $0x10] sm:$0xff]
        %v812 = vld [vmem:[#allocation6 + $0x18] sm:$0xff]
        %v813 = vld [vmem:[#allocation6 + $0x20] sm:$0xff]
        %v814 = vld [vmem:[#allocation6 + $0x28] sm:$0xff]
        %v815 = vld [vmem:[#allocation6 + $0x30] sm:$0xff]
        %v816 = vld [vmem:[#allocation6 + $0x38] sm:$0xff]
        %v817 = vld [vmem:[#allocation6 + $0x40] sm:$0xff]
        %v818 = vld [vmem:[#allocation6 + $0x48] sm:$0xff]
        %v819 = vld [vmem:[#allocation6 + $0x50] sm:$0xff]
        %v820 = vld [vmem:[#allocation6 + $0x58] sm:$0xff]
        %v821 = vld [vmem:[#allocation6 + $0x60] sm:$0xff]
        %v822 = vld [vmem:[#allocation6 + $0x68] sm:$0xff]
        %v823 = vld [vmem:[#allocation6 + $0x70] sm:$0xff]
        %v824 = vld [vmem:[#allocation6 + $0x78] sm:$0xff]
        %v825 = vld [vmem:[#allocation6 + $0x80] sm:$0xff]
        %v826 = vld [vmem:[#allocation6 + $0x88] sm:$0xff]
        %v827 = vld [vmem:[#allocation6 + $0x90] sm:$0xff]
        %v828 = vld [vmem:[#allocation6 + $0x98] sm:$0xff]
        %v829 = vld [vmem:[#allocation6 + $0xa0] sm:$0xff]
        %v830 = vld [vmem:[#allocation6 + $0xa8] sm:$0xff]
        %v831 = vld [vmem:[#allocation6 + $0xb0] sm:$0xff]
        %v832 = vld [vmem:[#allocation6 + $0xb8] sm:$0xf]
        %837 = vrot.lane.b32.xlu0 %v805, 112
        %v838 = vpop.permute.xlu0 %837
        %839 = vrot.lane.b32.xlu0 %v806, 112
        %v840 = vpop.permute.xlu0 %839
        %841 = vrot.lane.b32.xlu0 %v807, 112
        %v842 = vpop.permute.xlu0 %841
        %843 = vrot.lane.b32.xlu0 %v808, 112
        %v844 = vpop.permute.xlu0 %843
        %v845 = vsel %vm642, %v838, %v840
        %v846 = vsel %vm642, %v842, %v844
        %v851 = vmax.f32 %v805, %v845
        %v852 = vmax.f32 %v806, %v840
        %v853 = vmax.f32 %v807, %v846
        %v854 = vmax.f32 %v808, %v844
        %859 = vrot.lane.b32.xlu0 %v851, 127
        %v860 = vpop.permute.xlu0 %859
        %861 = vrot.lane.b32.xlu0 %v852, 127
        %v862 = vpop.permute.xlu0 %861
        %863 = vrot.lane.b32.xlu0 %v853, 127
        %v864 = vpop.permute.xlu0 %863
        %865 = vrot.lane.b32.xlu0 %v854, 127
        %v866 = vpop.permute.xlu0 %865
        %v867 = vsel %vm678, %v860, %v862
        %v868 = vsel %vm678, %v864, %v866
        %v873 = vmax.f32 %v851, %v867
        %v874 = vmax.f32 %v852, %v862
        %v875 = vmax.f32 %v853, %v868
        %v876 = vmax.f32 %v854, %v866
        %vm877 = vcmask 490496
        %v879 = vsel %vm877, %v874, 0
        %v882 = vsel %vm877, %v876, 0
        %vm884 = vcmask 1043456
        %v886 = vsel %vm884, %v832, 0
        %888 = vmatpush.msra.mxu0 %v824
        %889 = vmatpush.msra.mxu0 %v823
        %890 = vmatpush.msra.mxu0 %v822
        %891 = vmatpush.msra.mxu0 %v821
        %892 = vmatpush.msra.mxu0 %v820
        %893 = vmatpush.msra.mxu0 %v819
        %894 = vmatpush.msra.mxu0 %v818
        %895 = vmatpush.msra.mxu0 %v817
        %896 = vmatpush.msra.mxu0 %v816
        %897 = vmatpush.msra.mxu0 %v815
        %898 = vmatpush.msra.mxu0 %v814
        %899 = vmatpush.msra.mxu0 %v813
        %900 = vmatpush.msra.mxu0 %v812
        %901 = vmatpush.msra.mxu0 %v811
        %902 = vmatpush.msra.mxu0 %v810
        %903 = vmatpush.msra.mxu0 %v809
        %904 = vmatmul.f32.gmra.mxu0 %v873
        %v905 = vpop.f32.mrf.mxu0
        %v906 = vadd.f32 0.0, %v905
        %907 = vmatmul.f32.gmra.mxu0 %v875
        %v908 = vpop.f32.mrf.mxu0
        %v909 = vadd.f32 0.0, %v908
        %910 = vdwg.mxu0
        %911 = vmatpush.msra.mxu0 0.0
        %912 = vmatpush.msra.mxu0 0.0
        %913 = vmatpush.msra.mxu0 0.0
        %914 = vmatpush.msra.mxu0 0.0
        %915 = vmatpush.msra.mxu0 0.0
        %916 = vmatpush.msra.mxu0 0.0
        %917 = vmatpush.msra.mxu0 0.0
        %918 = vmatpush.msra.mxu0 0.0
        %919 = vmatpush.msra.mxu0 %v886
        %920 = vmatpush.msra.mxu0 %v831
        %921 = vmatpush.msra.mxu0 %v830
        %922 = vmatpush.msra.mxu0 %v829
        %923 = vmatpush.msra.mxu0 %v828
        %924 = vmatpush.msra.mxu0 %v827
        %925 = vmatpush.msra.mxu0 %v826
        %926 = vmatpush.msra.mxu0 %v825
        %927 = vmatmul.f32.gmra.mxu0 %v879
        %v928 = vpop.f32.mrf.mxu0
        %v929 = vadd.f32 %v906, %v928
        %930 = vmatmul.f32.gmra.mxu0 %v882
        %v931 = vpop.f32.mrf.mxu0
        %v932 = vadd.f32 %v909, %v931
        %933 = vdwg.mxu0
        %v934 = vld [vmem:[#allocation2] sm:$0xff]
        %v935 = vld [vmem:[#allocation2 + $0x8] sm:$0xff]
        %v936 = vld [vmem:[#allocation2 + $0x10] sm:$0xff]
        %v937 = vld [vmem:[#allocation2 + $0x18] sm:$0xff]
        %v938 = vld [vmem:[#allocation2 + $0x20] sm:$0xff]
        %v939 = vld [vmem:[#allocation2 + $0x28] sm:$0xff]
        %v940 = vld [vmem:[%s4] sm:$0xff]
        %v941 = vld [vmem:[%s4 + $0x8] sm:$0xff]
        %v942 = vld [vmem:[%s4 + $0x10] sm:$0xff]
        %945 = vrot.lane.b32.xlu0 %v929, 122
        %v946 = vpop.permute.xlu0 %945
        %947 = vrot.lane.b32.xlu0 %v932, 122
        %v948 = vpop.permute.xlu0 %947
        %951 = vrot.lane.b32.xlu0 %v929, 116
        %v952 = vpop.permute.xlu0 %951
        %953 = vrot.lane.b32.xlu0 %v932, 116
        %v954 = vpop.permute.xlu0 %953
        %957 = vrot.lane.b32.xlu0 %v929, 127
        %v958 = vpop.permute.xlu0 %957
        %959 = vrot.lane.b32.xlu0 %v932, 127
        %v960 = vpop.permute.xlu0 %959
        %961 = vrot.lane.b32.xlu0 %v946, 127
        %v962 = vpop.permute.xlu0 %961
        %963 = vrot.lane.b32.xlu0 %v948, 127
        %v964 = vpop.permute.xlu0 %963
        %965 = vrot.lane.b32.xlu0 %v952, 127
        %v966 = vpop.permute.xlu0 %965
        %967 = vrot.lane.b32.xlu0 %v954, 127
        %v968 = vpop.permute.xlu0 %967
        %975 = vrot.lane.b32.xlu0 %v929, 126
        %v976 = vpop.permute.xlu0 %975
        %977 = vrot.lane.b32.xlu0 %v932, 126
        %v978 = vpop.permute.xlu0 %977
        %979 = vrot.lane.b32.xlu0 %v946, 126
        %v980 = vpop.permute.xlu0 %979
        %981 = vrot.lane.b32.xlu0 %v948, 126
        %v982 = vpop.permute.xlu0 %981
        %983 = vrot.lane.b32.xlu0 %v952, 126
        %v984 = vpop.permute.xlu0 %983
        %985 = vrot.lane.b32.xlu0 %v954, 126
        %v986 = vpop.permute.xlu0 %985
        %994 = vset.pattern.permute.xlu0 0
        %995 = vperm.xlu0 %994, %v940
        %v996 = vpop.permute.xlu0 %995
        %999 = vset.pattern.permute.xlu0 0
        %1000 = vperm.xlu0 %999, %v941
        %v1001 = vpop.permute.xlu0 %1000
        %1004 = vset.pattern.permute.xlu0 0
        %1005 = vperm.xlu0 %1004, %v942
        %v1006 = vpop.permute.xlu0 %1005
        %vm1008 = vcmask 130048
        %v1010 = vsel %vm1008, %v935, 0
        %v1013 = vsel %vm1008, %v937, 0
        %v1016 = vsel %vm1008, %v939, 0
        %1018 = vmatpush.msra.mxu0 %v982
        %1019 = vmatpush.msra.mxu0 %v980
        %1020 = vmatpush.msra.mxu0 %v978
        %1021 = vmatpush.msra.mxu0 %v976
        %1022 = vmatpush.msra.mxu0 %v968
        %1023 = vmatpush.msra.mxu0 %v966
        %1024 = vmatpush.msra.mxu0 %v964
        %1025 = vmatpush.msra.mxu0 %v962
        %1026 = vmatpush.msra.mxu0 %v960
        %1027 = vmatpush.msra.mxu0 %v958
        %1028 = vmatpush.msra.mxu0 %v954
        %1029 = vmatpush.msra.mxu0 %v952
        %1030 = vmatpush.msra.mxu0 %v948
        %1031 = vmatpush.msra.mxu0 %v946
        %1032 = vmatpush.msra.mxu0 %v932
        %1033 = vmatpush.msra.mxu0 %v929
        %1034 = vmatmul.f32.gmra.mxu0 %v934
        %v1035 = vpop.f32.mrf.mxu0
        %v1036 = vadd.f32 %v996, %v1035
        %1037 = vmatmul.f32.gmra.mxu0 %v936
        %v1038 = vpop.f32.mrf.mxu0
        %v1039 = vadd.f32 %v1001, %v1038
        %1040 = vmatmul.f32.gmra.mxu0 %v938
        %v1041 = vpop.f32.mrf.mxu0
        %v1042 = vadd.f32 %v1006, %v1041
        %1043 = vdwg.mxu0
        %1044 = vmatpush.msra.mxu0 0.0
        %1045 = vmatpush.msra.mxu0 0.0
        %1046 = vmatpush.msra.mxu0 0.0
        %1047 = vmatpush.msra.mxu0 0.0
        %1048 = vmatpush.msra.mxu0 0.0
        %1049 = vmatpush.msra.mxu0 0.0
        %1050 = vmatpush.msra.mxu0 0.0
        %1051 = vmatpush.msra.mxu0 0.0
        %1052 = vmatpush.msra.mxu0 0.0
        %1053 = vmatpush.msra.mxu0 0.0
        %1054 = vmatpush.msra.mxu0 0.0
        %1055 = vmatpush.msra.mxu0 0.0
        %1056 = vmatpush.msra.mxu0 0.0
        %1057 = vmatpush.msra.mxu0 0.0
        %1058 = vmatpush.msra.mxu0 %v986
        %1059 = vmatpush.msra.mxu0 %v984
        %1060 = vmatmul.f32.gmra.mxu0 %v1010
        %v1061 = vpop.f32.mrf.mxu0
        %v1062 = vadd.f32 %v1036, %v1061
        %1063 = vmatmul.f32.gmra.mxu0 %v1013
        %v1064 = vpop.f32.mrf.mxu0
        %v1065 = vadd.f32 %v1039, %v1064
        %1066 = vmatmul.f32.gmra.mxu0 %v1016
        %v1067 = vpop.f32.mrf.mxu0
        %v1068 = vadd.f32 %v1042, %v1067
        %1069 = vdwg.mxu0
        %v1070 = vtanh.pop %v1062
        %v1071 = vtanh.pop %v1065
        %v1072 = vtanh.pop %v1068
        %v1073 = vld [vmem:[#allocation7] sm:$0xff]
        %v1074 = vld [vmem:[#allocation7 + $0x8] sm:$0x7f]
        %1078 = vrot.lane.b32.xlu0 %v1070, 122
        %v1079 = vpop.permute.xlu0 %1078
        %1080 = vrot.lane.b32.xlu0 %v1071, 122
        %v1081 = vpop.permute.xlu0 %1080
        %1082 = vrot.lane.b32.xlu0 %v1072, 122
        %v1083 = vpop.permute.xlu0 %1082
        %v1087 = vmax.f32 %v1070, %v1079
        %v1088 = vmax.f32 %v1071, %v1081
        %v1089 = vmax.f32 %v1072, %v1083
        %1093 = vrot.lane.b32.xlu0 %v1087, 127
        %v1094 = vpop.permute.xlu0 %1093
        %1095 = vrot.lane.b32.xlu0 %v1088, 127
        %v1096 = vpop.permute.xlu0 %1095
        %1097 = vrot.lane.b32.xlu0 %v1089, 127
        %v1098 = vpop.permute.xlu0 %1097
        %v1102 = vmax.f32 %v1087, %v1094
        %v1103 = vmax.f32 %v1088, %v1096
        %v1104 = vmax.f32 %v1089, %v1098
        %vm1105 = vcmask 121856
        %v1107 = vsel %vm1105, %v1102, 0
        %v1110 = vsel %vm1105, %v1103, 0
        %v1113 = vsel %vm1105, %v1104, 0
        %vm1115 = vcmask 1046528
        %v1117 = vsel %vm1115, %v1074, 0
        %1119 = vmatpush.msra.mxu0 0.0
        %1120 = vmatpush.msra.mxu0 0.0
        %1121 = vmatpush.msra.mxu0 0.0
        %1122 = vmatpush.msra.mxu0 0.0
        %1123 = vmatpush.msra.mxu0 0.0
        %1124 = vmatpush.msra.mxu0 0.0
        %1125 = vmatpush.msra.mxu0 0.0
        %1126 = vmatpush.msra.mxu0 0.0
        %1127 = vmatpush.msra.mxu0 0.0
        %1128 = vmatpush.msra.mxu0 0.0
        %1129 = vmatpush.msra.mxu0 0.0
        %1130 = vmatpush.msra.mxu0 0.0
        %1131 = vmatpush.msra.mxu0 0.0
        %1132 = vmatpush.msra.mxu0 0.0
        %1133 = vmatpush.msra.mxu0 %v1117
        %1134 = vmatpush.msra.mxu0 %v1073
        %1135 = vmatmul.f32.gmra.mxu0 %v1107
        %v1136 = vpop.f32.mrf.mxu0
        %v1137 = vadd.f32 0.0, %v1136
        %1138 = vmatmul.f32.gmra.mxu0 %v1110
        %v1139 = vpop.f32.mrf.mxu0
        %v1140 = vadd.f32 0.0, %v1139
        %1141 = vmatmul.f32.gmra.mxu0 %v1113
        %v1142 = vpop.f32.mrf.mxu0
        %v1143 = vadd.f32 0.0, %v1142
        %1144 = vdwg.mxu0
        %v1145 = vld [vmem:[%s13] sm:$0xf]
        %vm1146 = vcmask 31744
        %v1148 = vsel %vm1146, %v1137, 0
        %v1151 = vsel %vm1146, %v1140, 0
        %v1154 = vsel %vm1146, %v1143, 0
        %v1157 = vsel %vm884, %v1145, 0
        %1159 = vmatpush.msra.mxu0 0.0
        %1160 = vmatpush.msra.mxu0 0.0
        %1161 = vmatpush.msra.mxu0 0.0
        %1162 = vmatpush.msra.mxu0 0.0
        %1163 = vmatpush.msra.mxu0 0.0
        %1164 = vmatpush.msra.mxu0 0.0
        %1165 = vmatpush.msra.mxu0 0.0
        %1166 = vmatpush.msra.mxu0 0.0
        %1167 = vmatpush.msra.mxu0 0.0
        %1168 = vmatpush.msra.mxu0 0.0
        %1169 = vmatpush.msra.mxu0 0.0
        %1170 = vmatpush.msra.mxu0 0.0
        %1171 = vmatpush.msra.mxu0 0.0
        %1172 = vmatpush.msra.mxu0 0.0
        %1173 = vmatpush.msra.mxu0 0.0
        %1174 = vmatpush.msra.mxu0 %v1157
        %1175 = vmatmul.f32.gmra.mxu0 %v1148
        %v1176 = vpop.f32.mrf.mxu0
        %v1177 = vadd.f32 0.0, %v1176
        %1178 = vmatmul.f32.gmra.mxu0 %v1151
        %v1179 = vpop.f32.mrf.mxu0
        %v1180 = vadd.f32 0.0, %v1179
        %1181 = vmatmul.f32.gmra.mxu0 %v1154
        %v1182 = vpop.f32.mrf.mxu0
        %v1183 = vadd.f32 0.0, %v1182
        %1184 = vdwg.mxu0
        %v1185 = vld [vmem:[%s5] sm:$0xff]
        %v1186 = vld [vmem:[%s5 + $0x8] sm:$0xff]
        %v1187 = vld [vmem:[%s5 + $0x10] sm:$0xff]
        %v1188 = vld [vmem:[%s5 + $0x18] sm:$0xff]
        %v1189 = vld [vmem:[%s6] sm:$0xff]
        %v1190 = vld [vmem:[%s6 + $0x8] sm:$0xff]
        %1194 = vrot.lane.b32.xlu0 %v1177, 121
        %v1195 = vpop.permute.xlu0 %1194
        %1196 = vrot.lane.b32.xlu0 %v1180, 121
        %v1197 = vpop.permute.xlu0 %1196
        %1198 = vrot.lane.b32.xlu0 %v1183, 121
        %v1199 = vpop.permute.xlu0 %1198
        %1203 = vrot.lane.b32.xlu0 %v1177, 114
        %v1204 = vpop.permute.xlu0 %1203
        %1205 = vrot.lane.b32.xlu0 %v1180, 114
        %v1206 = vpop.permute.xlu0 %1205
        %1207 = vrot.lane.b32.xlu0 %v1183, 114
        %v1208 = vpop.permute.xlu0 %1207
        %1212 = vrot.lane.b32.xlu0 %v1177, 127
        %v1213 = vpop.permute.xlu0 %1212
        %1214 = vrot.lane.b32.xlu0 %v1180, 127
        %v1215 = vpop.permute.xlu0 %1214
        %1216 = vrot.lane.b32.xlu0 %v1183, 127
        %v1217 = vpop.permute.xlu0 %1216
        %1218 = vrot.lane.b32.xlu0 %v1195, 127
        %v1219 = vpop.permute.xlu0 %1218
        %1220 = vrot.lane.b32.xlu0 %v1197, 127
        %v1221 = vpop.permute.xlu0 %1220
        %1222 = vrot.lane.b32.xlu0 %v1199, 127
        %v1223 = vpop.permute.xlu0 %1222
        %1224 = vrot.lane.b32.xlu0 %v1204, 127
        %v1225 = vpop.permute.xlu0 %1224
        %1226 = vrot.lane.b32.xlu0 %v1206, 127
        %v1227 = vpop.permute.xlu0 %1226
        %1228 = vrot.lane.b32.xlu0 %v1208, 127
        %v1229 = vpop.permute.xlu0 %1228
        %1239 = vrot.lane.b32.xlu0 %v1177, 126
        %v1240 = vpop.permute.xlu0 %1239
        %1241 = vrot.lane.b32.xlu0 %v1180, 126
        %v1242 = vpop.permute.xlu0 %1241
        %1243 = vrot.lane.b32.xlu0 %v1183, 126
        %v1244 = vpop.permute.xlu0 %1243
        %1245 = vrot.lane.b32.xlu0 %v1195, 126
        %v1246 = vpop.permute.xlu0 %1245
        %1247 = vrot.lane.b32.xlu0 %v1197, 126
        %v1248 = vpop.permute.xlu0 %1247
        %1249 = vrot.lane.b32.xlu0 %v1199, 126
        %v1250 = vpop.permute.xlu0 %1249
        %1251 = vrot.lane.b32.xlu0 %v1204, 126
        %v1252 = vpop.permute.xlu0 %1251
        %1253 = vrot.lane.b32.xlu0 %v1206, 126
        %v1254 = vpop.permute.xlu0 %1253
        %1255 = vrot.lane.b32.xlu0 %v1208, 126
        %v1256 = vpop.permute.xlu0 %1255
        %1267 = vset.pattern.permute.xlu0 0
        %1268 = vperm.xlu0 %1267, %v1189
        %v1269 = vpop.permute.xlu0 %1268
        %1272 = vset.pattern.permute.xlu0 0
        %1273 = vperm.xlu0 %1272, %v1190
        %v1274 = vpop.permute.xlu0 %1273
        %vm1276 = vcmask 719872
        %v1278 = vsel %vm1276, %v1186, 0
        %v1281 = vsel %vm1276, %v1188, 0
        %1283 = vmatpush.msra.mxu0 %v1225
        %1284 = vmatpush.msra.mxu0 %v1223
        %1285 = vmatpush.msra.mxu0 %v1221
        %1286 = vmatpush.msra.mxu0 %v1219
        %1287 = vmatpush.msra.mxu0 %v1217
        %1288 = vmatpush.msra.mxu0 %v1215
        %1289 = vmatpush.msra.mxu0 %v1213
        %1290 = vmatpush.msra.mxu0 %v1208
        %1291 = vmatpush.msra.mxu0 %v1206
        %1292 = vmatpush.msra.mxu0 %v1204
        %1293 = vmatpush.msra.mxu0 %v1199
        %1294 = vmatpush.msra.mxu0 %v1197
        %1295 = vmatpush.msra.mxu0 %v1195
        %1296 = vmatpush.msra.mxu0 %v1183
        %1297 = vmatpush.msra.mxu0 %v1180
        %1298 = vmatpush.msra.mxu0 %v1177
        %1299 = vmatmul.f32.gmra.mxu0 %v1185
        %v1300 = vpop.f32.mrf.mxu0
        %v1301 = vadd.f32 %v1269, %v1300
        %1302 = vmatmul.f32.gmra.mxu0 %v1187
        %v1303 = vpop.f32.mrf.mxu0
        %v1304 = vadd.f32 %v1274, %v1303
        %1305 = vdwg.mxu0
        %1306 = vmatpush.msra.mxu0 0.0
        %1307 = vmatpush.msra.mxu0 0.0
        %1308 = vmatpush.msra.mxu0 0.0
        %1309 = vmatpush.msra.mxu0 0.0
        %1310 = vmatpush.msra.mxu0 0.0
        %1311 = vmatpush.msra.mxu0 %v1256
        %1312 = vmatpush.msra.mxu0 %v1254
        %1313 = vmatpush.msra.mxu0 %v1252
        %1314 = vmatpush.msra.mxu0 %v1250
        %1315 = vmatpush.msra.mxu0 %v1248
        %1316 = vmatpush.msra.mxu0 %v1246
        %1317 = vmatpush.msra.mxu0 %v1244
        %1318 = vmatpush.msra.mxu0 %v1242
        %1319 = vmatpush.msra.mxu0 %v1240
        %1320 = vmatpush.msra.mxu0 %v1229
        %1321 = vmatpush.msra.mxu0 %v1227
        %1322 = vmatmul.f32.gmra.mxu0 %v1278
        %v1323 = vpop.f32.mrf.mxu0
        %v1324 = vadd.f32 %v1301, %v1323
        %1325 = vmatmul.f32.gmra.mxu0 %v1281
        %v1326 = vpop.f32.mrf.mxu0
        %v1327 = vadd.f32 %v1304, %v1326
        %1328 = vdwg.mxu0
        %v1329 = vmax.f32 %v1324, 0.0
        %v1330 = vmax.f32 %v1327, 0.0
        %v1331 = vld [vmem:[%s14] sm:$0xff]
        %v1332 = vld [vmem:[%s14 + $0x8] sm:$0xff]
        %v1333 = vld [vmem:[%s14 + $0x10] sm:$0xff]
        %v1334 = vld [vmem:[%s14 + $0x18] sm:$0xff]
        %v1335 = vld [vmem:[%s14 + $0x20] sm:$0xff]
        %v1336 = vld [vmem:[%s14 + $0x28] sm:$0xff]
        %v1337 = vld [vmem:[%s14 + $0x30] sm:$0xff]
        %v1338 = vld [vmem:[%s14 + $0x38] sm:$0xff]
        %v1339 = vld [vmem:[%s14 + $0x40] sm:$0x1]
        %v1340 = vld [vmem:[%s14 + $0x48] sm:$0x1]
        %vm1341 = vcmask 269312
        %v1343 = vsel %vm1341, %v1329, 0
        %v1346 = vsel %vm1341, %v1330, 0
        %vm1348 = vcmask 1040384
        %v1350 = vsel %vm1348, %v1339, 0
        %v1353 = vsel %vm1348, %v1340, 0
        %1355 = vmatpush.msra.mxu0 0.0
        %1356 = vmatpush.msra.mxu0 0.0
        %1357 = vmatpush.msra.mxu0 0.0
        %1358 = vmatpush.msra.mxu0 0.0
        %1359 = vmatpush.msra.mxu0 0.0
        %1360 = vmatpush.msra.mxu0 0.0
        %1361 = vmatpush.msra.mxu0 0.0
        %1362 = vmatpush.msra.mxu0 0.0
        %1363 = vmatpush.msra.mxu0 0.0
        %1364 = vmatpush.msra.mxu0 0.0
        %1365 = vmatpush.msra.mxu0 0.0
        %1366 = vmatpush.msra.mxu0 %v1350
        %1367 = vmatpush.msra.mxu0 %v1337
        %1368 = vmatpush.msra.mxu0 %v1335
        %1369 = vmatpush.msra.mxu0 %v1333
        %1370 = vmatpush.msra.mxu0 %v1331
        %1371 = vmatmul.f32.gmra.mxu0 %v1343
        %v1372 = vpop.f32.mrf.mxu0
        %v1373 = vadd.f32 0.0, %v1372
        %1374 = vmatmul.f32.gmra.mxu0 %v1346
        %v1375 = vpop.f32.mrf.mxu0
        %v1376 = vadd.f32 0.0, %v1375
        %1377 = vdwg.mxu0
        %1378 = vmatpush.msra.mxu0 0.0
        %1379 = vmatpush.msra.mxu0 0.0
        %1380 = vmatpush.msra.mxu0 0.0
        %1381 = vmatpush.msra.mxu0 0.0
        %1382 = vmatpush.msra.mxu0 0.0
        %1383 = vmatpush.msra.mxu0 0.0
        %1384 = vmatpush.msra.mxu0 0.0
        %1385 = vmatpush.msra.mxu0 0.0
        %1386 = vmatpush.msra.mxu0 0.0
        %1387 = vmatpush.msra.mxu0 0.0
        %1388 = vmatpush.msra.mxu0 0.0
        %1389 = vmatpush.msra.mxu0 %v1353
        %1390 = vmatpush.msra.mxu0 %v1338
        %1391 = vmatpush.msra.mxu0 %v1336
        %1392 = vmatpush.msra.mxu0 %v1334
        %1393 = vmatpush.msra.mxu0 %v1332
        %1394 = vmatmul.f32.gmra.mxu0 %v1343
        %v1395 = vpop.f32.mrf.mxu0
        %v1396 = vadd.f32 0.0, %v1395
        %1397 = vmatmul.f32.gmra.mxu0 %v1346
        %v1398 = vpop.f32.mrf.mxu0
        %v1399 = vadd.f32 0.0, %v1398
        %1400 = vdwg.mxu0
        %v1401 = vld [vmem:[%s7] sm:$0xff]
        %v1402 = vld [vmem:[%s7 + $0x8] sm:$0xff]
        %v1403 = vld [vmem:[%s8] sm:$0xff]
        %1408 = vrot.lane.b32.xlu0 %v1373, 115
        %v1409 = vpop.permute.xlu0 %1408
        %1410 = vrot.lane.b32.xlu0 %v1396, 115
        %v1411 = vpop.permute.xlu0 %1410
        %1412 = vrot.lane.b32.xlu0 %v1376, 115
        %v1413 = vpop.permute.xlu0 %1412
        %1414 = vrot.lane.b32.xlu0 %v1399, 115
        %v1415 = vpop.permute.xlu0 %1414
        %vm1416 = vcmask 941056
        %v1417 = vsel %vm1416, %v1409, %v1411
        %v1418 = vsel %vm1416, %v1413, %v1415
        %1423 = vrot.lane.b32.xlu0 %v1373, 102
        %v1424 = vpop.permute.xlu0 %1423
        %1425 = vrot.lane.b32.xlu0 %v1396, 102
        %v1426 = vpop.permute.xlu0 %1425
        %1427 = vrot.lane.b32.xlu0 %v1376, 102
        %v1428 = vpop.permute.xlu0 %1427
        %1429 = vrot.lane.b32.xlu0 %v1399, 102
        %v1430 = vpop.permute.xlu0 %1429
        %vm1431 = vcmask 834560
        %v1432 = vsel %vm1431, %v1424, %v1426
        %v1433 = vsel %vm1431, %v1428, %v1430
        %1438 = vrot.lane.b32.xlu0 %v1373, 127
        %v1439 = vpop.permute.xlu0 %1438
        %1440 = vrot.lane.b32.xlu0 %v1396, 127
        %v1441 = vpop.permute.xlu0 %1440
        %1442 = vrot.lane.b32.xlu0 %v1376, 127
        %v1443 = vpop.permute.xlu0 %1442
        %1444 = vrot.lane.b32.xlu0 %v1399, 127
        %v1445 = vpop.permute.xlu0 %1444
        %1446 = vrot.lane.b32.xlu0 %v1417, 127
        %v1447 = vpop.permute.xlu0 %1446
        %1448 = vrot.lane.b32.xlu0 %v1411, 127
        %v1449 = vpop.permute.xlu0 %1448
        %1450 = vrot.lane.b32.xlu0 %v1418, 127
        %v1451 = vpop.permute.xlu0 %1450
        %1452 = vrot.lane.b32.xlu0 %v1415, 127
        %v1453 = vpop.permute.xlu0 %1452
        %1454 = vrot.lane.b32.xlu0 %v1432, 127
        %v1455 = vpop.permute.xlu0 %1454
        %1456 = vrot.lane.b32.xlu0 %v1426, 127
        %v1457 = vpop.permute.xlu0 %1456
        %1458 = vrot.lane.b32.xlu0 %v1433, 127
        %v1459 = vpop.permute.xlu0 %1458
        %1460 = vrot.lane.b32.xlu0 %v1430, 127
        %v1461 = vpop.permute.xlu0 %1460
        %v1462 = vsel %vm678, %v1439, %v1441
        %v1463 = vsel %vm678, %v1443, %v1445
        %v1464 = vsel %vm678, %v1447, %v1449
        %v1465 = vsel %vm678, %v1451, %v1453
        %v1466 = vsel %vm678, %v1455, %v1457
        %v1467 = vsel %vm678, %v1459, %v1461
        %1480 = vrot.lane.b32.xlu0 %v1373, 126
        %v1481 = vpop.permute.xlu0 %1480
        %1482 = vrot.lane.b32.xlu0 %v1396, 126
        %v1483 = vpop.permute.xlu0 %1482
        %1484 = vrot.lane.b32.xlu0 %v1376, 126
        %v1485 = vpop.permute.xlu0 %1484
        %1486 = vrot.lane.b32.xlu0 %v1399, 126
        %v1487 = vpop.permute.xlu0 %1486
        %1488 = vrot.lane.b32.xlu0 %v1417, 126
        %v1489 = vpop.permute.xlu0 %1488
        %1490 = vrot.lane.b32.xlu0 %v1411, 126
        %v1491 = vpop.permute.xlu0 %1490
        %1492 = vrot.lane.b32.xlu0 %v1418, 126
        %v1493 = vpop.permute.xlu0 %1492
        %1494 = vrot.lane.b32.xlu0 %v1415, 126
        %v1495 = vpop.permute.xlu0 %1494
        %1496 = vrot.lane.b32.xlu0 %v1432, 126
        %v1497 = vpop.permute.xlu0 %1496
        %1498 = vrot.lane.b32.xlu0 %v1426, 126
        %v1499 = vpop.permute.xlu0 %1498
        %1500 = vrot.lane.b32.xlu0 %v1433, 126
        %v1501 = vpop.permute.xlu0 %1500
        %1502 = vrot.lane.b32.xlu0 %v1430, 126
        %v1503 = vpop.permute.xlu0 %1502
        %v1504 = vsel %vm707, %v1481, %v1483
        %v1505 = vsel %vm707, %v1485, %v1487
        %v1506 = vsel %vm707, %v1489, %v1491
        %v1507 = vsel %vm707, %v1493, %v1495
        %v1508 = vsel %vm707, %v1497, %v1499
        %v1509 = vsel %vm707, %v1501, %v1503
        %1523 = vset.pattern.permute.xlu0 0
        %1524 = vperm.xlu0 %1523, %v1403
        %v1525 = vpop.permute.xlu0 %1524
        %v1528 = vsel %vm1008, %v1402, 0
        %1530 = vmatpush.msra.mxu0 %v1507
        %1531 = vmatpush.msra.mxu0 %v1506
        %1532 = vmatpush.msra.mxu0 %v1505
        %1533 = vmatpush.msra.mxu0 %v1504
        %1534 = vmatpush.msra.mxu0 %v1467
        %1535 = vmatpush.msra.mxu0 %v1466
        %1536 = vmatpush.msra.mxu0 %v1465
        %1537 = vmatpush.msra.mxu0 %v1464
        %1538 = vmatpush.msra.mxu0 %v1463
        %1539 = vmatpush.msra.mxu0 %v1462
        %1540 = vmatpush.msra.mxu0 %v1433
        %1541 = vmatpush.msra.mxu0 %v1432
        %1542 = vmatpush.msra.mxu0 %v1418
        %1543 = vmatpush.msra.mxu0 %v1417
        %1544 = vmatpush.msra.mxu0 %v1376
        %1545 = vmatpush.msra.mxu0 %v1373
        %1546 = vmatmul.f32.gmra.mxu0 %v1401
        %v1547 = vpop.f32.mrf.mxu0
        %v1548 = vadd.f32 %v1525, %v1547
        %1549 = vdwg.mxu0
        %1550 = vmatpush.msra.mxu0 0.0
        %1551 = vmatpush.msra.mxu0 0.0
        %1552 = vmatpush.msra.mxu0 0.0
        %1553 = vmatpush.msra.mxu0 0.0
        %1554 = vmatpush.msra.mxu0 0.0
        %1555 = vmatpush.msra.mxu0 0.0
        %1556 = vmatpush.msra.mxu0 0.0
        %1557 = vmatpush.msra.mxu0 0.0
        %1558 = vmatpush.msra.mxu0 0.0
        %1559 = vmatpush.msra.mxu0 0.0
        %1560 = vmatpush.msra.mxu0 0.0
        %1561 = vmatpush.msra.mxu0 0.0
        %1562 = vmatpush.msra.mxu0 0.0
        %1563 = vmatpush.msra.mxu0 0.0
        %1564 = vmatpush.msra.mxu0 %v1509
        %1565 = vmatpush.msra.mxu0 %v1508
        %1566 = vmatmul.f32.gmra.mxu0 %v1528
        %v1567 = vpop.f32.mrf.mxu0
        %v1568 = vadd.f32 %v1548, %v1567
        %1569 = vdwg.mxu0
        %1570 = vmatpush.msra.mxu0 %v1495
        %1571 = vmatpush.msra.mxu0 %v1491
        %1572 = vmatpush.msra.mxu0 %v1487
        %1573 = vmatpush.msra.mxu0 %v1483
        %1574 = vmatpush.msra.mxu0 %v1461
        %1575 = vmatpush.msra.mxu0 %v1457
        %1576 = vmatpush.msra.mxu0 %v1453
        %1577 = vmatpush.msra.mxu0 %v1449
        %1578 = vmatpush.msra.mxu0 %v1445
        %1579 = vmatpush.msra.mxu0 %v1441
        %1580 = vmatpush.msra.mxu0 %v1430
        %1581 = vmatpush.msra.mxu0 %v1426
        %1582 = vmatpush.msra.mxu0 %v1415
        %1583 = vmatpush.msra.mxu0 %v1411
        %1584 = vmatpush.msra.mxu0 %v1399
        %1585 = vmatpush.msra.mxu0 %v1396
        %1586 = vmatmul.f32.gmra.mxu0 %v1401
        %v1587 = vpop.f32.mrf.mxu0
        %v1588 = vadd.f32 %v1525, %v1587
        %1589 = vdwg.mxu0
        %1590 = vmatpush.msra.mxu0 0.0
        %1591 = vmatpush.msra.mxu0 0.0
        %1592 = vmatpush.msra.mxu0 0.0
        %1593 = vmatpush.msra.mxu0 0.0
        %1594 = vmatpush.msra.mxu0 0.0
        %1595 = vmatpush.msra.mxu0 0.0
        %1596 = vmatpush.msra.mxu0 0.0
        %1597 = vmatpush.msra.mxu0 0.0
        %1598 = vmatpush.msra.mxu0 0.0
        %1599 = vmatpush.msra.mxu0 0.0
        %1600 = vmatpush.msra.mxu0 0.0
        %1601 = vmatpush.msra.mxu0 0.0
        %1602 = vmatpush.msra.mxu0 0.0
        %1603 = vmatpush.msra.mxu0 0.0
        %1604 = vmatpush.msra.mxu0 %v1503
        %1605 = vmatpush.msra.mxu0 %v1499
        %1606 = vmatmul.f32.gmra.mxu0 %v1528
        %v1607 = vpop.f32.mrf.mxu0
        %v1608 = vadd.f32 %v1588, %v1607
        %1609 = vdwg.mxu0
        %v1610 = vmax.f32 %v1568, 0.0
        %v1611 = vmax.f32 %v1608, 0.0
        %v1612 = vld [vmem:[#allocation9] sm:$0xff]
        %v1613 = vld [vmem:[#allocation9 + $0x8] sm:$0xff]
        %v1614 = vld [vmem:[#allocation9 + $0x10] sm:$0xff]
        %v1615 = vld [vmem:[#allocation9 + $0x18] sm:$0xff]
        %v1616 = vld [vmem:[#allocation9 + $0x20] sm:$0xff]
        %v1617 = vld [vmem:[#allocation9 + $0x28] sm:$0xff]
        %v1618 = vld [vmem:[#allocation9 + $0x30] sm:$0xff]
        %v1619 = vld [vmem:[#allocation9 + $0x38] sm:$0xff]
        %v1620 = vld [vmem:[#allocation9 + $0x40] sm:$0xff]
        %v1621 = vld [vmem:[#allocation9 + $0x48] sm:$0xff]
        %v1622 = vld [vmem:[#allocation9 + $0x50] sm:$0xff]
        %v1623 = vld [vmem:[#allocation9 + $0x58] sm:$0xff]
        %v1624 = vld [vmem:[#allocation9 + $0x60] sm:$0xff]
        %v1625 = vld [vmem:[#allocation9 + $0x68] sm:$0xff]
        %v1626 = vld [vmem:[#allocation9 + $0x70] sm:$0xff]
        %v1627 = vld [vmem:[#allocation9 + $0x78] sm:$0xff]
        %v1628 = vld [vmem:[#allocation9 + $0x80] sm:$0xff]
        %v1629 = vld [vmem:[#allocation9 + $0x88] sm:$0xff]
        %v1630 = vld [vmem:[#allocation9 + $0x90] sm:$0xff]
        %v1631 = vld [vmem:[#allocation9 + $0x98] sm:$0xff]
        %v1632 = vld [vmem:[#allocation9 + $0xa0] sm:$0xff]
        %v1633 = vld [vmem:[#allocation9 + $0xa8] sm:$0xff]
        %v1634 = vld [vmem:[#allocation9 + $0xb0] sm:$0xff]
        %v1635 = vld [vmem:[#allocation9 + $0xb8] sm:$0xff]
        %v1636 = vld [vmem:[#allocation9 + $0xc0] sm:$0xff]
        %v1637 = vld [vmem:[#allocation9 + $0xc8] sm:$0xff]
        %v1638 = vld [vmem:[#allocation9 + $0xd0] sm:$0xff]
        %v1639 = vld [vmem:[#allocation9 + $0xd8] sm:$0xff]
        %v1640 = vld [vmem:[#allocation9 + $0xe0] sm:$0xff]
        %v1641 = vld [vmem:[#allocation9 + $0xe8] sm:$0xff]
        %v1642 = vld [vmem:[#allocation9 + $0xf0] sm:$0xff]
        %v1643 = vld [vmem:[#allocation9 + $0xf8] sm:$0xff]
        %v1644 = vld [vmem:[#allocation9 + $0x100] sm:$0xff]
        %v1645 = vld [vmem:[#allocation9 + $0x108] sm:$0xff]
        %v1646 = vld [vmem:[#allocation9 + $0x110] sm:$0xff]
        %v1647 = vld [vmem:[#allocation9 + $0x118] sm:$0xff]
        %v1648 = vld [vmem:[#allocation9 + $0x120] sm:$0xff]
        %v1649 = vld [vmem:[#allocation9 + $0x128] sm:$0xff]
        %v1650 = vld [vmem:[#allocation9 + $0x130] sm:$0xff]
        %v1651 = vld [vmem:[#allocation9 + $0x138] sm:$0xff]
        %v1652 = vld [vmem:[#allocation9 + $0x140] sm:$0xff]
        %v1653 = vld [vmem:[#allocation9 + $0x148] sm:$0xff]
        %v1654 = vld [vmem:[#allocation9 + $0x150] sm:$0xff]
        %v1655 = vld [vmem:[#allocation9 + $0x158] sm:$0xff]
        %v1656 = vld [vmem:[#allocation9 + $0x160] sm:$0xff]
        %v1657 = vld [vmem:[#allocation9 + $0x168] sm:$0xff]
        %v1658 = vld [vmem:[#allocation9 + $0x170] sm:$0xff]
        %v1659 = vld [vmem:[#allocation9 + $0x178] sm:$0xff]
        %v1660 = vld [vmem:[#allocation9 + $0x180] sm:$0xff]
        %v1661 = vld [vmem:[#allocation9 + $0x188] sm:$0xff]
        %v1662 = vld [vmem:[#allocation9 + $0x190] sm:$0xff]
        %v1663 = vld [vmem:[#allocation9 + $0x198] sm:$0x1f]
        %v1664 = vld [vmem:[#allocation9 + $0x1a0] sm:$0x1f]
        %v1665 = vld [vmem:[#allocation9 + $0x1a8] sm:$0x1f]
        %vm1666 = vcmask 105472
        %v1668 = vsel %vm1666, %v1611, 0
        %vm1670 = vcmask 1044480
        %v1672 = vsel %vm1670, %v1663, 0
        %v1675 = vsel %vm1670, %v1664, 0
        %v1678 = vsel %vm1670, %v1665, 0
        %1680 = vmatpush.msra.mxu0 %v1657
        %1681 = vmatpush.msra.mxu0 %v1654
        %1682 = vmatpush.msra.mxu0 %v1651
        %1683 = vmatpush.msra.mxu0 %v1648
        %1684 = vmatpush.msra.mxu0 %v1645
        %1685 = vmatpush.msra.mxu0 %v1642
        %1686 = vmatpush.msra.mxu0 %v1639
        %1687 = vmatpush.msra.mxu0 %v1636
        %1688 = vmatpush.msra.mxu0 %v1633
        %1689 = vmatpush.msra.mxu0 %v1630
        %1690 = vmatpush.msra.mxu0 %v1627
        %1691 = vmatpush.msra.mxu0 %v1624
        %1692 = vmatpush.msra.mxu0 %v1621
        %1693 = vmatpush.msra.mxu0 %v1618
        %1694 = vmatpush.msra.mxu0 %v1615
        %1695 = vmatpush.msra.mxu0 %v1612
        %1696 = vmatmul.f32.gmra.mxu0 %v1610
        %v1697 = vpop.f32.mrf.mxu0
        %v1698 = vadd.f32 0.0, %v1697
        %1699 = vdwg.mxu0
        %1700 = vmatpush.msra.mxu0 0.0
        %1701 = vmatpush.msra.mxu0 0.0
        %1702 = vmatpush.msra.mxu0 0.0
        %1703 = vmatpush.msra.mxu0 0.0
        %1704 = vmatpush.msra.mxu0 0.0
        %1705 = vmatpush.msra.mxu0 0.0
        %1706 = vmatpush.msra.mxu0 0.0
        %1707 = vmatpush.msra.mxu0 0.0
        %1708 = vmatpush.msra.mxu0 0.0
        %1709 = vmatpush.msra.mxu0 0.0
        %1710 = vmatpush.msra.mxu0 0.0
        %1711 = vmatpush.msra.mxu0 0.0
        %1712 = vmatpush.msra.mxu0 0.0
        %1713 = vmatpush.msra.mxu0 0.0
        %1714 = vmatpush.msra.mxu0 %v1672
        %1715 = vmatpush.msra.mxu0 %v1660
        %1716 = vmatmul.f32.gmra.mxu0 %v1668
        %v1717 = vpop.f32.mrf.mxu0
        %v1718 = vadd.f32 %v1698, %v1717
        %1719 = vdwg.mxu0
        %1720 = vmatpush.msra.mxu0 %v1658
        %1721 = vmatpush.msra.mxu0 %v1655
        %1722 = vmatpush.msra.mxu0 %v1652
        %1723 = vmatpush.msra.mxu0 %v1649
        %1724 = vmatpush.msra.mxu0 %v1646
        %1725 = vmatpush.msra.mxu0 %v1643
        %1726 = vmatpush.msra.mxu0 %v1640
        %1727 = vmatpush.msra.mxu0 %v1637
        %1728 = vmatpush.msra.mxu0 %v1634
        %1729 = vmatpush.msra.mxu0 %v1631
        %1730 = vmatpush.msra.mxu0 %v1628
        %1731 = vmatpush.msra.mxu0 %v1625
        %1732 = vmatpush.msra.mxu0 %v1622
        %1733 = vmatpush.msra.mxu0 %v1619
        %1734 = vmatpush.msra.mxu0 %v1616
        %1735 = vmatpush.msra.mxu0 %v1613
        %1736 = vmatmul.f32.gmra.mxu0 %v1610
        %v1737 = vpop.f32.mrf.mxu0
        %v1738 = vadd.f32 0.0, %v1737
        %1739 = vdwg.mxu0
        %1740 = vmatpush.msra.mxu0 0.0
        %1741 = vmatpush.msra.mxu0 0.0
        %1742 = vmatpush.msra.mxu0 0.0
        %1743 = vmatpush.msra.mxu0 0.0
        %1744 = vmatpush.msra.mxu0 0.0
        %1745 = vmatpush.msra.mxu0 0.0
        %1746 = vmatpush.msra.mxu0 0.0
        %1747 = vmatpush.msra.mxu0 0.0
        %1748 = vmatpush.msra.mxu0 0.0
        %1749 = vmatpush.msra.mxu0 0.0
        %1750 = vmatpush.msra.mxu0 0.0
        %1751 = vmatpush.msra.mxu0 0.0
        %1752 = vmatpush.msra.mxu0 0.0
        %1753 = vmatpush.msra.mxu0 0.0
        %1754 = vmatpush.msra.mxu0 %v1675
        %1755 = vmatpush.msra.mxu0 %v1661
        %1756 = vmatmul.f32.gmra.mxu0 %v1668
        %v1757 = vpop.f32.mrf.mxu0
        %v1758 = vadd.f32 %v1738, %v1757
        %1759 = vdwg.mxu0
        %1760 = vmatpush.msra.mxu0 %v1659
        %1761 = vmatpush.msra.mxu0 %v1656
        %1762 = vmatpush.msra.mxu0 %v1653
        %1763 = vmatpush.msra.mxu0 %v1650
        %1764 = vmatpush.msra.mxu0 %v1647
        %1765 = vmatpush.msra.mxu0 %v1644
        %1766 = vmatpush.msra.mxu0 %v1641
        %1767 = vmatpush.msra.mxu0 %v1638
        %1768 = vmatpush.msra.mxu0 %v1635
        %1769 = vmatpush.msra.mxu0 %v1632
        %1770 = vmatpush.msra.mxu0 %v1629
        %1771 = vmatpush.msra.mxu0 %v1626
        %1772 = vmatpush.msra.mxu0 %v1623
        %1773 = vmatpush.msra.mxu0 %v1620
        %1774 = vmatpush.msra.mxu0 %v1617
        %1775 = vmatpush.msra.mxu0 %v1614
        %1776 = vmatmul.f32.gmra.mxu0 %v1610
        %v1777 = vpop.f32.mrf.mxu0
        %v1778 = vadd.f32 0.0, %v1777
        %1779 = vdwg.mxu0
        %1780 = vmatpush.msra.mxu0 0.0
        %1781 = vmatpush.msra.mxu0 0.0
        %1782 = vmatpush.msra.mxu0 0.0
        %1783 = vmatpush.msra.mxu0 0.0
        %1784 = vmatpush.msra.mxu0 0.0
        %1785 = vmatpush.msra.mxu0 0.0
        %1786 = vmatpush.msra.mxu0 0.0
        %1787 = vmatpush.msra.mxu0 0.0
        %1788 = vmatpush.msra.mxu0 0.0
        %1789 = vmatpush.msra.mxu0 0.0
        %1790 = vmatpush.msra.mxu0 0.0
        %1791 = vmatpush.msra.mxu0 0.0
        %1792 = vmatpush.msra.mxu0 0.0
        %1793 = vmatpush.msra.mxu0 0.0
        %1794 = vmatpush.msra.mxu0 %v1678
        %1795 = vmatpush.msra.mxu0 %v1662
        %1796 = vmatmul.f32.gmra.mxu0 %v1668
        %v1797 = vpop.f32.mrf.mxu0
        %v1798 = vadd.f32 %v1778, %v1797
        %1799 = vdwg.mxu0
        %v1800 = vld [vmem:[#allocation4] sm:$0xff]
        %v1801 = vld [vmem:[#allocation4 + $0x8] sm:$0xff]
        %v1802 = vld [vmem:[%s10] sm:$0xff]
        %1806 = vrot.lane.b32.xlu0 %v1718, 109
        %v1807 = vpop.permute.xlu0 %1806
        %1808 = vrot.lane.b32.xlu0 %v1758, 109
        %v1809 = vpop.permute.xlu0 %1808
        %1810 = vrot.lane.b32.xlu0 %v1798, 109
        %v1811 = vpop.permute.xlu0 %1810
        %vm1812 = vcmask 891904
        %v1813 = vsel %vm1812, %v1807, %v1809
        %v1814 = vsel %vm1812, %v1809, %v1811
        %1818 = vrot.lane.b32.xlu0 %v1718, 90
        %v1819 = vpop.permute.xlu0 %1818
        %1820 = vrot.lane.b32.xlu0 %v1758, 90
        %v1821 = vpop.permute.xlu0 %1820
        %1822 = vrot.lane.b32.xlu0 %v1798, 90
        %v1823 = vpop.permute.xlu0 %1822
        %vm1824 = vcmask 736256
        %v1825 = vsel %vm1824, %v1819, %v1821
        %v1826 = vsel %vm1824, %v1821, %v1823
        %1830 = vrot.lane.b32.xlu0 %v1718, 71
        %v1831 = vpop.permute.xlu0 %1830
        %1832 = vrot.lane.b32.xlu0 %v1758, 71
        %v1833 = vpop.permute.xlu0 %1832
        %1834 = vrot.lane.b32.xlu0 %v1798, 71
        %v1835 = vpop.permute.xlu0 %1834
        %vm1836 = vcmask 580608
        %v1837 = vsel %vm1836, %v1831, %v1833
        %v1838 = vsel %vm1836, %v1833, %v1835
        %1842 = vrot.lane.b32.xlu0 %v1718, 52
        %v1843 = vpop.permute.xlu0 %1842
        %1844 = vrot.lane.b32.xlu0 %v1758, 52
        %v1845 = vpop.permute.xlu0 %1844
        %1846 = vrot.lane.b32.xlu0 %v1798, 52
        %v1847 = vpop.permute.xlu0 %1846
        %vm1848 = vcmask 424960
        %v1849 = vsel %vm1848, %v1843, %v1845
        %v1850 = vsel %vm1848, %v1845, %v1847
        %1854 = vrot.lane.b32.xlu0 %v1718, 127
        %v1855 = vpop.permute.xlu0 %1854
        %1856 = vrot.lane.b32.xlu0 %v1758, 127
        %v1857 = vpop.permute.xlu0 %1856
        %1858 = vrot.lane.b32.xlu0 %v1798, 127
        %v1859 = vpop.permute.xlu0 %1858
        %1860 = vrot.lane.b32.xlu0 %v1813, 127
        %v1861 = vpop.permute.xlu0 %1860
        %1862 = vrot.lane.b32.xlu0 %v1814, 127
        %v1863 = vpop.permute.xlu0 %1862
        %1864 = vrot.lane.b32.xlu0 %v1811, 127
        %v1865 = vpop.permute.xlu0 %1864
        %1866 = vrot.lane.b32.xlu0 %v1825, 127
        %v1867 = vpop.permute.xlu0 %1866
        %1868 = vrot.lane.b32.xlu0 %v1826, 127
        %v1869 = vpop.permute.xlu0 %1868
        %1870 = vrot.lane.b32.xlu0 %v1823, 127
        %v1871 = vpop.permute.xlu0 %1870
        %1872 = vrot.lane.b32.xlu0 %v1837, 127
        %v1873 = vpop.permute.xlu0 %1872
        %1874 = vrot.lane.b32.xlu0 %v1838, 127
        %v1875 = vpop.permute.xlu0 %1874
        %1876 = vrot.lane.b32.xlu0 %v1835, 127
        %v1877 = vpop.permute.xlu0 %1876
        %1878 = vrot.lane.b32.xlu0 %v1849, 127
        %v1879 = vpop.permute.xlu0 %1878
        %1880 = vrot.lane.b32.xlu0 %v1850, 127
        %v1881 = vpop.permute.xlu0 %1880
        %1882 = vrot.lane.b32.xlu0 %v1847, 127
        %v1883 = vpop.permute.xlu0 %1882
        %v1884 = vsel %vm678, %v1855, %v1857
        %v1885 = vsel %vm678, %v1857, %v1859
        %v1886 = vsel %vm678, %v1861, %v1863
        %v1887 = vsel %vm678, %v1863, %v1865
        %v1888 = vsel %vm678, %v1867, %v1869
        %v1889 = vsel %vm678, %v1869, %v1871
        %v1890 = vsel %vm678, %v1873, %v1875
        %v1891 = vsel %vm678, %v1875, %v1877
        %v1892 = vsel %vm678, %v1879, %v1881
        %v1893 = vsel %vm678, %v1881, %v1883
        %1909 = vrot.lane.b32.xlu0 %v1718, 126
        %v1910 = vpop.permute.xlu0 %1909
        %1911 = vrot.lane.b32.xlu0 %v1758, 126
        %v1912 = vpop.permute.xlu0 %1911
        %1913 = vrot.lane.b32.xlu0 %v1798, 126
        %v1914 = vpop.permute.xlu0 %1913
        %1915 = vrot.lane.b32.xlu0 %v1813, 126
        %v1916 = vpop.permute.xlu0 %1915
        %1917 = vrot.lane.b32.xlu0 %v1814, 126
        %v1918 = vpop.permute.xlu0 %1917
        %1919 = vrot.lane.b32.xlu0 %v1811, 126
        %v1920 = vpop.permute.xlu0 %1919
        %1921 = vrot.lane.b32.xlu0 %v1825, 126
        %v1922 = vpop.permute.xlu0 %1921
        %1923 = vrot.lane.b32.xlu0 %v1826, 126
        %v1924 = vpop.permute.xlu0 %1923
        %1925 = vrot.lane.b32.xlu0 %v1823, 126
        %v1926 = vpop.permute.xlu0 %1925
        %1927 = vrot.lane.b32.xlu0 %v1837, 126
        %v1928 = vpop.permute.xlu0 %1927
        %1929 = vrot.lane.b32.xlu0 %v1838, 126
        %v1930 = vpop.permute.xlu0 %1929
        %1931 = vrot.lane.b32.xlu0 %v1835, 126
        %v1932 = vpop.permute.xlu0 %1931
        %1933 = vrot.lane.b32.xlu0 %v1849, 126
        %v1934 = vpop.permute.xlu0 %1933
        %1935 = vrot.lane.b32.xlu0 %v1850, 126
        %v1936 = vpop.permute.xlu0 %1935
        %1937 = vrot.lane.b32.xlu0 %v1847, 126
        %v1938 = vpop.permute.xlu0 %1937
        %v1939 = vsel %vm707, %v1910, %v1912
        %v1940 = vsel %vm707, %v1912, %v1914
        %v1941 = vsel %vm707, %v1916, %v1918
        %v1942 = vsel %vm707, %v1918, %v1920
        %v1943 = vsel %vm707, %v1922, %v1924
        %v1944 = vsel %vm707, %v1924, %v1926
        %v1945 = vsel %vm707, %v1928, %v1930
        %v1946 = vsel %vm707, %v1930, %v1932
        %v1947 = vsel %vm707, %v1934, %v1936
        %v1948 = vsel %vm707, %v1936, %v1938
        %1964 = vrot.lane.b32.xlu0 %v1718, 125
        %v1965 = vpop.permute.xlu0 %1964
        %1966 = vrot.lane.b32.xlu0 %v1758, 125
        %v1967 = vpop.permute.xlu0 %1966
        %1968 = vrot.lane.b32.xlu0 %v1798, 125
        %v1969 = vpop.permute.xlu0 %1968
        %1970 = vrot.lane.b32.xlu0 %v1813, 125
        %v1971 = vpop.permute.xlu0 %1970
        %1972 = vrot.lane.b32.xlu0 %v1814, 125
        %v1973 = vpop.permute.xlu0 %1972
        %1974 = vrot.lane.b32.xlu0 %v1811, 125
        %v1975 = vpop.permute.xlu0 %1974
        %1976 = vrot.lane.b32.xlu0 %v1825, 125
        %v1977 = vpop.permute.xlu0 %1976
        %1978 = vrot.lane.b32.xlu0 %v1826, 125
        %v1979 = vpop.permute.xlu0 %1978
        %1980 = vrot.lane.b32.xlu0 %v1823, 125
        %v1981 = vpop.permute.xlu0 %1980
        %1982 = vrot.lane.b32.xlu0 %v1837, 125
        %v1983 = vpop.permute.xlu0 %1982
        %1984 = vrot.lane.b32.xlu0 %v1838, 125
        %v1985 = vpop.permute.xlu0 %1984
        %1986 = vrot.lane.b32.xlu0 %v1835, 125
        %v1987 = vpop.permute.xlu0 %1986
        %1988 = vrot.lane.b32.xlu0 %v1849, 125
        %v1989 = vpop.permute.xlu0 %1988
        %1990 = vrot.lane.b32.xlu0 %v1850, 125
        %v1991 = vpop.permute.xlu0 %1990
        %1992 = vrot.lane.b32.xlu0 %v1847, 125
        %v1993 = vpop.permute.xlu0 %1992
        %v1994 = vsel %vm736, %v1965, %v1967
        %v1995 = vsel %vm736, %v1967, %v1969
        %v1996 = vsel %vm736, %v1971, %v1973
        %v1997 = vsel %vm736, %v1973, %v1975
        %v1998 = vsel %vm736, %v1977, %v1979
        %v1999 = vsel %vm736, %v1979, %v1981
        %v2000 = vsel %vm736, %v1983, %v1985
        %v2001 = vsel %vm736, %v1985, %v1987
        %v2002 = vsel %vm736, %v1989, %v1991
        %v2003 = vsel %vm736, %v1991, %v1993
        %2019 = vrot.lane.b32.xlu0 %v1718, 124
        %v2020 = vpop.permute.xlu0 %2019
        %2021 = vrot.lane.b32.xlu0 %v1758, 124
        %v2022 = vpop.permute.xlu0 %2021
        %2023 = vrot.lane.b32.xlu0 %v1798, 124
        %v2024 = vpop.permute.xlu0 %2023
        %2025 = vrot.lane.b32.xlu0 %v1813, 124
        %v2026 = vpop.permute.xlu0 %2025
        %2027 = vrot.lane.b32.xlu0 %v1814, 124
        %v2028 = vpop.permute.xlu0 %2027
        %2029 = vrot.lane.b32.xlu0 %v1811, 124
        %v2030 = vpop.permute.xlu0 %2029
        %2031 = vrot.lane.b32.xlu0 %v1825, 124
        %v2032 = vpop.permute.xlu0 %2031
        %2033 = vrot.lane.b32.xlu0 %v1826, 124
        %v2034 = vpop.permute.xlu0 %2033
        %2035 = vrot.lane.b32.xlu0 %v1823, 124
        %v2036 = vpop.permute.xlu0 %2035
        %2037 = vrot.lane.b32.xlu0 %v1837, 124
        %v2038 = vpop.permute.xlu0 %2037
        %2039 = vrot.lane.b32.xlu0 %v1838, 124
        %v2040 = vpop.permute.xlu0 %2039
        %2041 = vrot.lane.b32.xlu0 %v1835, 124
        %v2042 = vpop.permute.xlu0 %2041
        %2043 = vrot.lane.b32.xlu0 %v1849, 124
        %v2044 = vpop.permute.xlu0 %2043
        %2045 = vrot.lane.b32.xlu0 %v1850, 124
        %v2046 = vpop.permute.xlu0 %2045
        %2047 = vrot.lane.b32.xlu0 %v1847, 124
        %v2048 = vpop.permute.xlu0 %2047
        %vm2049 = vcmask 1014784
        %v2050 = vsel %vm2049, %v2020, %v2022
        %v2051 = vsel %vm2049, %v2022, %v2024
        %v2052 = vsel %vm2049, %v2026, %v2028
        %v2053 = vsel %vm2049, %v2028, %v2030
        %v2054 = vsel %vm2049, %v2032, %v2034
        %v2055 = vsel %vm2049, %v2034, %v2036
        %v2056 = vsel %vm2049, %v2038, %v2040
        %v2057 = vsel %vm2049, %v2040, %v2042
        %v2058 = vsel %vm2049, %v2044, %v2046
        %v2059 = vsel %vm2049, %v2046, %v2048
        %2076 = vset.pattern.permute.xlu0 0
        %2077 = vperm.xlu0 %2076, %v1802
        %v2078 = vpop.permute.xlu0 %2077
        %vm2080 = vcmask 588800
        %v2082 = vsel %vm2080, %v1801, 0
        %2084 = vmatpush.msra.mxu0 %v1994
        %2085 = vmatpush.msra.mxu0 %v1947
        %2086 = vmatpush.msra.mxu0 %v1945
        %2087 = vmatpush.msra.mxu0 %v1943
        %2088 = vmatpush.msra.mxu0 %v1941
        %2089 = vmatpush.msra.mxu0 %v1939
        %2090 = vmatpush.msra.mxu0 %v1892
        %2091 = vmatpush.msra.mxu0 %v1890
        %2092 = vmatpush.msra.mxu0 %v1888
        %2093 = vmatpush.msra.mxu0 %v1886
        %2094 = vmatpush.msra.mxu0 %v1884
        %2095 = vmatpush.msra.mxu0 %v1849
        %2096 = vmatpush.msra.mxu0 %v1837
        %2097 = vmatpush.msra.mxu0 %v1825
        %2098 = vmatpush.msra.mxu0 %v1813
        %2099 = vmatpush.msra.mxu0 %v1718
        %2100 = vmatmul.f32.gmra.mxu0 %v1800
        %v2101 = vpop.f32.mrf.mxu0
        %v2102 = vadd.f32 %v2078, %v2101
        %2103 = vdwg.mxu0
        %2104 = vmatpush.msra.mxu0 0.0
        %2105 = vmatpush.msra.mxu0 0.0
        %2106 = vmatpush.msra.mxu0 0.0
        %2107 = vmatpush.msra.mxu0 0.0
        %2108 = vmatpush.msra.mxu0 0.0
        %2109 = vmatpush.msra.mxu0 0.0
        %2110 = vmatpush.msra.mxu0 0.0
        %2111 = vmatpush.msra.mxu0 %v2058
        %2112 = vmatpush.msra.mxu0 %v2056
        %2113 = vmatpush.msra.mxu0 %v2054
        %2114 = vmatpush.msra.mxu0 %v2052
        %2115 = vmatpush.msra.mxu0 %v2050
        %2116 = vmatpush.msra.mxu0 %v2002
        %2117 = vmatpush.msra.mxu0 %v2000
        %2118 = vmatpush.msra.mxu0 %v1998
        %2119 = vmatpush.msra.mxu0 %v1996
        %2120 = vmatmul.f32.gmra.mxu0 %v2082
        %v2121 = vpop.f32.mrf.mxu0
        %v2122 = vadd.f32 %v2102, %v2121
        %2123 = vdwg.mxu0
        %2124 = vmatpush.msra.mxu0 %v1995
        %2125 = vmatpush.msra.mxu0 %v1948
        %2126 = vmatpush.msra.mxu0 %v1946
        %2127 = vmatpush.msra.mxu0 %v1944
        %2128 = vmatpush.msra.mxu0 %v1942
        %2129 = vmatpush.msra.mxu0 %v1940
        %2130 = vmatpush.msra.mxu0 %v1893
        %2131 = vmatpush.msra.mxu0 %v1891
        %2132 = vmatpush.msra.mxu0 %v1889
        %2133 = vmatpush.msra.mxu0 %v1887
        %2134 = vmatpush.msra.mxu0 %v1885
        %2135 = vmatpush.msra.mxu0 %v1850
        %2136 = vmatpush.msra.mxu0 %v1838
        %2137 = vmatpush.msra.mxu0 %v1826
        %2138 = vmatpush.msra.mxu0 %v1814
        %2139 = vmatpush.msra.mxu0 %v1758
        %2140 = vmatmul.f32.gmra.mxu0 %v1800
        %v2141 = vpop.f32.mrf.mxu0
        %v2142 = vadd.f32 %v2078, %v2141
        %2143 = vdwg.mxu0
        %2144 = vmatpush.msra.mxu0 0.0
        %2145 = vmatpush.msra.mxu0 0.0
        %2146 = vmatpush.msra.mxu0 0.0
        %2147 = vmatpush.msra.mxu0 0.0
        %2148 = vmatpush.msra.mxu0 0.0
        %2149 = vmatpush.msra.mxu0 0.0
        %2150 = vmatpush.msra.mxu0 0.0
        %2151 = vmatpush.msra.mxu0 %v2059
        %2152 = vmatpush.msra.mxu0 %v2057
        %2153 = vmatpush.msra.mxu0 %v2055
        %2154 = vmatpush.msra.mxu0 %v2053
        %2155 = vmatpush.msra.mxu0 %v2051
        %2156 = vmatpush.msra.mxu0 %v2003
        %2157 = vmatpush.msra.mxu0 %v2001
        %2158 = vmatpush.msra.mxu0 %v1999
        %2159 = vmatpush.msra.mxu0 %v1997
        %2160 = vmatmul.f32.gmra.mxu0 %v2082
        %v2161 = vpop.f32.mrf.mxu0
        %v2162 = vadd.f32 %v2142, %v2161
        %2163 = vdwg.mxu0
        %2164 = vmatpush.msra.mxu0 %v1969
        %2165 = vmatpush.msra.mxu0 %v1938
        %2166 = vmatpush.msra.mxu0 %v1932
        %2167 = vmatpush.msra.mxu0 %v1926
        %2168 = vmatpush.msra.mxu0 %v1920
        %2169 = vmatpush.msra.mxu0 %v1914
        %2170 = vmatpush.msra.mxu0 %v1883
        %2171 = vmatpush.msra.mxu0 %v1877
        %2172 = vmatpush.msra.mxu0 %v1871
        %2173 = vmatpush.msra.mxu0 %v1865
        %2174 = vmatpush.msra.mxu0 %v1859
        %2175 = vmatpush.msra.mxu0 %v1847
        %2176 = vmatpush.msra.mxu0 %v1835
        %2177 = vmatpush.msra.mxu0 %v1823
        %2178 = vmatpush.msra.mxu0 %v1811
        %2179 = vmatpush.msra.mxu0 %v1798
        %2180 = vmatmul.f32.gmra.mxu0 %v1800
        %v2181 = vpop.f32.mrf.mxu0
        %v2182 = vadd.f32 %v2078, %v2181
        %2183 = vdwg.mxu0
        %2184 = vmatpush.msra.mxu0 0.0
        %2185 = vmatpush.msra.mxu0 0.0
        %2186 = vmatpush.msra.mxu0 0.0
        %2187 = vmatpush.msra.mxu0 0.0
        %2188 = vmatpush.msra.mxu0 0.0
        %2189 = vmatpush.msra.mxu0 0.0
        %2190 = vmatpush.msra.mxu0 0.0
        %2191 = vmatpush.msra.mxu0 %v2048
        %2192 = vmatpush.msra.mxu0 %v2042
        %2193 = vmatpush.msra.mxu0 %v2036
        %2194 = vmatpush.msra.mxu0 %v2030
        %2195 = vmatpush.msra.mxu0 %v2024
        %2196 = vmatpush.msra.mxu0 %v1993
        %2197 = vmatpush.msra.mxu0 %v1987
        %2198 = vmatpush.msra.mxu0 %v1981
        %2199 = vmatpush.msra.mxu0 %v1975
        %2200 = vmatmul.f32.gmra.mxu0 %v2082
        %v2201 = vpop.f32.mrf.mxu0
        %v2202 = vadd.f32 %v2182, %v2201
        %2203 = vdwg.mxu0
        %v2204 = vtanh.pop %v2122
        %v2205 = vtanh.pop %v2162
        %v2206 = vtanh.pop %v2202
        %v2207 = vld [vmem:[%s16] sm:$0xff]
        %v2208 = vld [vmem:[%s16 + $0x8] sm:$0xff]
        %v2209 = vld [vmem:[%s16 + $0x10] sm:$0xff]
        %v2210 = vld [vmem:[%s16 + $0x18] sm:$0xff]
        %v2211 = vld [vmem:[%s16 + $0x20] sm:$0xff]
        %v2212 = vld [vmem:[%s16 + $0x28] sm:$0xff]
        %v2213 = vld [vmem:[%s16 + $0x30] sm:$0xff]
        %v2214 = vld [vmem:[%s16 + $0x38] sm:$0xff]
        %v2215 = vld [vmem:[%s16 + $0x40] sm:$0xff]
        %v2216 = vld [vmem:[%s16 + $0x48] sm:$0xff]
        %v2217 = vld [vmem:[%s16 + $0x50] sm:$0xff]
        %v2218 = vld [vmem:[%s16 + $0x58] sm:$0xff]
        %v2219 = vld [vmem:[%s16 + $0x60] sm:$0xff]
        %v2220 = vld [vmem:[%s16 + $0x68] sm:$0xff]
        %v2221 = vld [vmem:[%s16 + $0x70] sm:$0xff]
        %v2222 = vld [vmem:[%s16 + $0x78] sm:$0xff]
        %v2223 = vld [vmem:[%s16 + $0x80] sm:$0xff]
        %v2224 = vld [vmem:[%s16 + $0x88] sm:$0xff]
        %v2225 = vld [vmem:[%s16 + $0x90] sm:$0xff]
        %v2226 = vld [vmem:[%s16 + $0x98] sm:$0xff]
        %v2227 = vld [vmem:[%s16 + $0xa0] sm:$0xff]
        %v2228 = vld [vmem:[%s16 + $0xa8] sm:$0xff]
        %v2229 = vld [vmem:[%s16 + $0xb0] sm:$0xff]
        %v2230 = vld [vmem:[%s16 + $0xb8] sm:$0xff]
        %v2231 = vld [vmem:[%s16 + $0xc0] sm:$0xff]
        %v2232 = vld [vmem:[%s16 + $0xc8] sm:$0xff]
        %v2233 = vld [vmem:[%s16 + $0xd0] sm:$0xff]
        %v2234 = vld [vmem:[%s16 + $0xd8] sm:$0xff]
        %v2235 = vld [vmem:[%s16 + $0xe0] sm:$0xff]
        %v2236 = vld [vmem:[%s16 + $0xe8] sm:$0xff]
        %v2237 = vld [vmem:[%s16 + $0xf0] sm:$0xff]
        %v2238 = vld [vmem:[%s16 + $0xf8] sm:$0xff]
        %v2239 = vld [vmem:[%s16 + $0x100] sm:$0xff]
        %v2240 = vld [vmem:[%s16 + $0x108] sm:$0xff]
        %v2241 = vld [vmem:[%s16 + $0x110] sm:$0xff]
        %v2242 = vld [vmem:[%s16 + $0x118] sm:$0xff]
        %v2243 = vld [vmem:[%s16 + $0x120] sm:$0xff]
        %v2244 = vld [vmem:[%s16 + $0x128] sm:$0xff]
        %v2245 = vld [vmem:[%s16 + $0x130] sm:$0xff]
        %v2246 = vld [vmem:[%s16 + $0x138] sm:$0xff]
        %v2247 = vld [vmem:[%s16 + $0x140] sm:$0xff]
        %v2248 = vld [vmem:[%s16 + $0x148] sm:$0xff]
        %v2249 = vld [vmem:[%s16 + $0x150] sm:$0xff]
        %v2250 = vld [vmem:[%s16 + $0x158] sm:$0xff]
        %v2251 = vld [vmem:[%s16 + $0x160] sm:$0xff]
        %v2252 = vld [vmem:[%s16 + $0x168] sm:$0xff]
        %v2253 = vld [vmem:[%s16 + $0x170] sm:$0xff]
        %v2254 = vld [vmem:[%s16 + $0x178] sm:$0xff]
        %v2255 = vld [vmem:[%s16 + $0x180] sm:$0xff]
        %v2256 = vld [vmem:[%s16 + $0x188] sm:$0xff]
        %v2257 = vld [vmem:[%s16 + $0x190] sm:$0xff]
        %v2258 = vld [vmem:[%s16 + $0x198] sm:$0xff]
        %v2259 = vld [vmem:[%s16 + $0x1a0] sm:$0xff]
        %v2260 = vld [vmem:[%s16 + $0x1a8] sm:$0xff]
        %v2261 = vld [vmem:[%s16 + $0x1b0] sm:$0xff]
        %v2262 = vld [vmem:[%s16 + $0x1b8] sm:$0xff]
        %v2263 = vld [vmem:[%s16 + $0x1c0] sm:$0xff]
        %v2264 = vld [vmem:[%s16 + $0x1c8] sm:$0xff]
        %v2265 = vld [vmem:[%s16 + $0x1d0] sm:$0xff]
        %v2266 = vld [vmem:[%s16 + $0x1d8] sm:$0xff]
        %v2267 = vld [vmem:[%s16 + $0x1e0] sm:$0xff]
        %v2268 = vld [vmem:[%s16 + $0x1e8] sm:$0xff]
        %v2269 = vld [vmem:[%s16 + $0x1f0] sm:$0xff]
        %v2270 = vld [vmem:[%s16 + $0x1f8] sm:$0xff]
        %v2271 = vld [vmem:[%s16 + $0x200] sm:$0xff]
        %v2272 = vld [vmem:[%s16 + $0x208] sm:$0xff]
        %v2273 = vld [vmem:[%s16 + $0x210] sm:$0xff]
        %v2274 = vld [vmem:[%s16 + $0x218] sm:$0xff]
        %v2275 = vld [vmem:[%s16 + $0x220] sm:$0xff]
        %v2276 = vld [vmem:[%s16 + $0x228] sm:$0xff]
        %v2277 = vld [vmem:[%s16 + $0x230] sm:$0x1]
        %v2278 = vld [vmem:[%s16 + $0x238] sm:$0x1]
        %vm2279 = vcmask 203776
        %v2281 = vsel %vm2279, %v2206, 0
        %v2284 = vsel %vm1348, %v2277, 0
        %v2287 = vsel %vm1348, %v2278, 0
        %2289 = vmatpush.msra.mxu0 %v2237
        %2290 = vmatpush.msra.mxu0 %v2235
        %2291 = vmatpush.msra.mxu0 %v2233
        %2292 = vmatpush.msra.mxu0 %v2231
        %2293 = vmatpush.msra.mxu0 %v2229
        %2294 = vmatpush.msra.mxu0 %v2227
        %2295 = vmatpush.msra.mxu0 %v2225
        %2296 = vmatpush.msra.mxu0 %v2223
        %2297 = vmatpush.msra.mxu0 %v2221
        %2298 = vmatpush.msra.mxu0 %v2219
        %2299 = vmatpush.msra.mxu0 %v2217
        %2300 = vmatpush.msra.mxu0 %v2215
        %2301 = vmatpush.msra.mxu0 %v2213
        %2302 = vmatpush.msra.mxu0 %v2211
        %2303 = vmatpush.msra.mxu0 %v2209
        %2304 = vmatpush.msra.mxu0 %v2207
        %2305 = vmatmul.f32.gmra.mxu0 %v2204
        %v2306 = vpop.f32.mrf.mxu0
        %v2307 = vadd.f32 0.0, %v2306
        %2308 = vdwg.mxu0
        %2309 = vmatpush.msra.mxu0 %v2269
        %2310 = vmatpush.msra.mxu0 %v2267
        %2311 = vmatpush.msra.mxu0 %v2265
        %2312 = vmatpush.msra.mxu0 %v2263
        %2313 = vmatpush.msra.mxu0 %v2261
        %2314 = vmatpush.msra.mxu0 %v2259
        %2315 = vmatpush.msra.mxu0 %v2257
        %2316 = vmatpush.msra.mxu0 %v2255
        %2317 = vmatpush.msra.mxu0 %v2253
        %2318 = vmatpush.msra.mxu0 %v2251
        %2319 = vmatpush.msra.mxu0 %v2249
        %2320 = vmatpush.msra.mxu0 %v2247
        %2321 = vmatpush.msra.mxu0 %v2245
        %2322 = vmatpush.msra.mxu0 %v2243
        %2323 = vmatpush.msra.mxu0 %v2241
        %2324 = vmatpush.msra.mxu0 %v2239
        %2325 = vmatmul.f32.gmra.mxu0 %v2205
        %v2326 = vpop.f32.mrf.mxu0
        %v2327 = vadd.f32 %v2307, %v2326
        %2328 = vdwg.mxu0
        %2329 = vmatpush.msra.mxu0 0.0
        %2330 = vmatpush.msra.mxu0 0.0
        %2331 = vmatpush.msra.mxu0 0.0
        %2332 = vmatpush.msra.mxu0 0.0
        %2333 = vmatpush.msra.mxu0 0.0
        %2334 = vmatpush.msra.mxu0 0.0
        %2335 = vmatpush.msra.mxu0 0.0
        %2336 = vmatpush.msra.mxu0 0.0
        %2337 = vmatpush.msra.mxu0 0.0
        %2338 = vmatpush.msra.mxu0 0.0
        %2339 = vmatpush.msra.mxu0 0.0
        %2340 = vmatpush.msra.mxu0 0.0
        %2341 = vmatpush.msra.mxu0 %v2284
        %2342 = vmatpush.msra.mxu0 %v2275
        %2343 = vmatpush.msra.mxu0 %v2273
        %2344 = vmatpush.msra.mxu0 %v2271
        %2345 = vmatmul.f32.gmra.mxu0 %v2281
        %v2346 = vpop.f32.mrf.mxu0
        %v2347 = vadd.f32 %v2327, %v2346
        %2348 = vdwg.mxu0
        %2349 = vmatpush.msra.mxu0 %v2238
        %2350 = vmatpush.msra.mxu0 %v2236
        %2351 = vmatpush.msra.mxu0 %v2234
        %2352 = vmatpush.msra.mxu0 %v2232
        %2353 = vmatpush.msra.mxu0 %v2230
        %2354 = vmatpush.msra.mxu0 %v2228
        %2355 = vmatpush.msra.mxu0 %v2226
        %2356 = vmatpush.msra.mxu0 %v2224
        %2357 = vmatpush.msra.mxu0 %v2222
        %2358 = vmatpush.msra.mxu0 %v2220
        %2359 = vmatpush.msra.mxu0 %v2218
        %2360 = vmatpush.msra.mxu0 %v2216
        %2361 = vmatpush.msra.mxu0 %v2214
        %2362 = vmatpush.msra.mxu0 %v2212
        %2363 = vmatpush.msra.mxu0 %v2210
        %2364 = vmatpush.msra.mxu0 %v2208
        %2365 = vmatmul.f32.gmra.mxu0 %v2204
        %v2366 = vpop.f32.mrf.mxu0
        %v2367 = vadd.f32 0.0, %v2366
        %2368 = vdwg.mxu0
        %2369 = vmatpush.msra.mxu0 %v2270
        %2370 = vmatpush.msra.mxu0 %v2268
        %2371 = vmatpush.msra.mxu0 %v2266
        %2372 = vmatpush.msra.mxu0 %v2264
        %2373 = vmatpush.msra.mxu0 %v2262
        %2374 = vmatpush.msra.mxu0 %v2260
        %2375 = vmatpush.msra.mxu0 %v2258
        %2376 = vmatpush.msra.mxu0 %v2256
        %2377 = vmatpush.msra.mxu0 %v2254
        %2378 = vmatpush.msra.mxu0 %v2252
        %2379 = vmatpush.msra.mxu0 %v2250
        %2380 = vmatpush.msra.mxu0 %v2248
        %2381 = vmatpush.msra.mxu0 %v2246
        %2382 = vmatpush.msra.mxu0 %v2244
        %2383 = vmatpush.msra.mxu0 %v2242
        %2384 = vmatpush.msra.mxu0 %v2240
        %2385 = vmatmul.f32.gmra.mxu0 %v2205
        %v2386 = vpop.f32.mrf.mxu0
        %v2387 = vadd.f32 %v2367, %v2386
        %2388 = vdwg.mxu0
        %2389 = vmatpush.msra.mxu0 0.0
        %2390 = vmatpush.msra.mxu0 0.0
        %2391 = vmatpush.msra.mxu0 0.0
        %2392 = vmatpush.msra.mxu0 0.0
        %2393 = vmatpush.msra.mxu0 0.0
        %2394 = vmatpush.msra.mxu0 0.0
        %2395 = vmatpush.msra.mxu0 0.0
        %2396 = vmatpush.msra.mxu0 0.0
        %2397 = vmatpush.msra.mxu0 0.0
        %2398 = vmatpush.msra.mxu0 0.0
        %2399 = vmatpush.msra.mxu0 0.0
        %2400 = vmatpush.msra.mxu0 0.0
        %2401 = vmatpush.msra.mxu0 %v2287
        %2402 = vmatpush.msra.mxu0 %v2276
        %2403 = vmatpush.msra.mxu0 %v2274
        %2404 = vmatpush.msra.mxu0 %v2272
        %2405 = vmatmul.f32.gmra.mxu0 %v2281
        %v2406 = vpop.f32.mrf.mxu0
        %v2407 = vadd.f32 %v2387, %v2406
        %2408 = vdwg.mxu0
        %2409 = vst [vmem:[%s629] sm:$0xff] %v2347
        %vm2410 = vcmask 793600
        %2411 = vst.msk [vmem:[%s629 + $0x8] sm:$0xff] %vm2410, %v2407
        %p2412 = scmp.lt.s32.totalorder %s31, 1
        %s2413 = scalar_select %p2412, %s31, 1
        %s2414 = smul.addr %s2413, 2
        %s2415 = smul.addr %s2414, 8
        %s2416 = scalar_lea.vmem %s17, %s2415
        // Predicated region
        $region109: #{autoencoder_forward.1} parent=87 // pred_check
          %p2417 = pneg %p411
        $region110: #{autoencoder_forward.1} parent=87 // pred_check_branch
          %2419 = sbr.rel (%p2417) target = $region112
        $region111: #{autoencoder_forward.1} parent=87 // pred_region
          _
        $region112: #{autoencoder_forward.1} parent=87 // pred_fallthru
          _
      $region88: #{autoencoder_forward.1} parent=5 // pred_fallthru
        _
      %p2420 = scmp.le.s32.totalorder 2, %s26
      // Predicated region
      $region113: #{autoencoder_forward.1} parent=5 // pred_check
        %p2421 = pneg %p2420
      $region114: #{autoencoder_forward.1} parent=5 // pred_check_branch
        %2423 = sbr.rel (%p2421) target = $region116
      $region115: #{autoencoder_forward.1} parent=5 // pred_region
        %s2424 = ssub.s32 %s26, 2
        // Predicated region
        $region117: #{autoencoder_forward.1} parent=115 // pred_check
          %p2425 = pneg %p417
        $region118: #{autoencoder_forward.1} parent=115 // pred_check_branch
          %2427 = sbr.rel (%p2425) target = $region120
        $region119: #{autoencoder_forward.1} parent=115 // pred_region
          %p2428 = scmp.lt.s32.totalorder %s32, 1
          %s2429 = scalar_select %p2428, %s32, 1
          %s2430 = smul.addr %s2429, 2
          %s2431 = smul.addr %s2430, 8
          %s2432 = scalar_lea.vmem %s17, %s2431
        $region120: #{autoencoder_forward.1} parent=115 // pred_fallthru
          _
      $region116: #{autoencoder_forward.1} parent=5 // pred_fallthru
        _
    $region6: #{autoencoder_forward.1} parent=1 // loop_footer
      %s30 = sadd.s32 1, %s26
    $region7: #{autoencoder_forward.1} parent=1 // loop_footer_branch
      %25 = sbr.rel target = $region3
    $region8: #{autoencoder_forward.1} parent=1 // loop_exit
      _
    %2433 = vsyncpa [#allocation3], 1
    %s2434 = scalar_lea.sflag [#allocation3], 1
    %2435 = vsyncpa %s2434, 1
    %2436 = vsyncpa [#allocation5], 1
    %2437 = vsyncpa [#allocation8], 1

</llo_original>
